<compile_context>
chip_gen: v7x
topology: tpu7x:2x2x1
jax: 0.10.0
libtpu: 0.0.40
codegen_flags: <defaults>
</compile_context>

<pallas_src>
import math
from functools import partial

import jax
import jax.numpy as jnp
from jax.experimental import pallas as pl
from jax.experimental.pallas import tpu as pltpu


def _round_up(x, m):
    return (x + m - 1) // m * m


def _num_tensorcores():
    # v7x has 2 TensorCores per chip; v5e/v6e have 1.  Fall back to 1 if unknown.
    try:
        kind = jax.devices()[0].device_kind.lower()
    except Exception:
        return 1
    return 2 if "7" in kind else 1


# ----------------------------------------------------------------------------
# Fused kernel: one grid step == b_blk batch elements.
# Sequence refs arrive pre-flattened: (b_blk * seq, feat).
# ----------------------------------------------------------------------------
def _det_encoder_kernel(
    cxy_ref, tx_ref,
    wxf_ref, bxf_ref,                      # fused layer-0 (value | key), bf16 / f32 bias
    w1_ref, b1_ref, w2_ref, b2_ref,        # value-path layers 1, 2
    wk1_ref, bk1_ref,                      # key-path layer 1
    wq0_ref, bq0_ref, wq1_ref, bq1_ref,    # query-path layers 0, 1
    out_ref,
    *, b_blk, n_ctx, n_tgt, h_pad, scale,
):
    f32, bf16 = jnp.float32, jnp.bfloat16
    cxy = cxy_ref[...].astype(bf16)   # (b_blk*n_ctx, x_dim+y_dim)
    tx = tx_ref[...].astype(bf16)     # (b_blk*n_tgt, x_dim)

    # --- fully fused layer-0: one MXU call yields both value- and key-path layer 0
    hx = jnp.dot(cxy, wxf_ref[...], preferred_element_type=f32) + bxf_ref[...]  # (M, 2*h_pad)
    h_val = jnp.maximum(hx[:, :h_pad], 0.0).astype(bf16)
    h_key = jnp.maximum(hx[:, h_pad:], 0.0).astype(bf16)

    # --- value path: BatchMLP(in_dim -> H), 3 layers (Lin+ReLU, Lin+ReLU, Lin)
    h_val = jnp.maximum(
        jnp.dot(h_val, w1_ref[...], preferred_element_type=f32) + b1_ref[...], 0.0
    ).astype(bf16)
    d_enc = (jnp.dot(h_val, w2_ref[...], preferred_element_type=f32)
             + b2_ref[...]).astype(bf16)

    # --- key path: BatchMLP(x_dim -> H), 2 layers (Lin+ReLU, Lin)
    k = (jnp.dot(h_key, wk1_ref[...], preferred_element_type=f32)
         + bk1_ref[...]).astype(bf16)

    # --- query path: BatchMLP(x_dim -> H), 2 layers (Lin+ReLU, Lin)
    hq = jnp.maximum(
        jnp.dot(tx, wq0_ref[...], preferred_element_type=f32) + bq0_ref[...], 0.0
    ).astype(bf16)
    q = (jnp.dot(hq, wq1_ref[...], preferred_element_type=f32)
         + bq1_ref[...]).astype(bf16)

    # --- batched scaled-dot cross attention (softmax over the context axis, f32)
    d_enc = d_enc.reshape(b_blk, n_ctx, h_pad)
    k = k.reshape(b_blk, n_ctx, h_pad)
    q = q.reshape(b_blk, n_tgt, h_pad)

    scores = jnp.einsum("bqd,bkd->bqk", q, k, preferred_element_type=f32) * scale
    scores = scores - jnp.max(scores, axis=-1, keepdims=True)
    e = jnp.exp(scores)
    attn = (e / jnp.sum(e, axis=-1, keepdims=True)).astype(bf16)
    out = jnp.einsum("bqk,bkd->bqd", attn, d_enc, preferred_element_type=f32)
    out_ref[...] = out.reshape(b_blk * n_tgt, h_pad)


# ----------------------------------------------------------------------------
# Host-side weight packing: fuse layer-0 (value | key) weights over the concat
# input [cx|cy], zero-pad hidden dims to 128 lanes, cast weights to bf16.
# Biases stay f32 (added after the f32-accumulated matmul).
# ----------------------------------------------------------------------------
def _pad_cols(a, c):
    p = c - a.shape[-1]
    return jnp.pad(a, [(0, 0)] * (a.ndim - 1) + [(0, p)]) if p else a


def _pad_rows(a, r):
    p = r - a.shape[0]
    return jnp.pad(a, [(0, p)] + [(0, 0)] * (a.ndim - 1)) if p else a


_PACKED_ORDER = ("wxf", "bxf", "w1", "b1", "w2", "b2",
                 "wk1", "bk1", "wq0", "bq0", "wq1", "bq1")


def _pack_params(params, y_dim, h_pad):
    bf16, f32 = jnp.bfloat16, jnp.float32
    pc = lambda a: _pad_cols(a, h_pad)
    prc = lambda a: _pad_cols(_pad_rows(a, h_pad), h_pad)
    # Key-path layer-0 weight extended with zero rows for the y part so the
    # concat input [cx|cy] can drive both paths with a single matmul.
    wk0_ext = jnp.concatenate(
        [params["wk0"], jnp.zeros((y_dim,) + params["wk0"].shape[1:], f32)], axis=0)
    return {
        "wxf": jnp.concatenate([pc(params["w0"]), pc(wk0_ext)], axis=1).astype(bf16),
        "bxf": jnp.concatenate([pc(params["b0"]), pc(params["bk0"])], axis=1).astype(f32),
        "w1": prc(params["w1"]).astype(bf16), "b1": pc(params["b1"]).astype(f32),
        "w2": prc(params["w2"]).astype(bf16), "b2": pc(params["b2"]).astype(f32),
        "wk1": prc(params["wk1"]).astype(bf16), "bk1": pc(params["bk1"]).astype(f32),
        "wq0": pc(params["wq0"]).astype(bf16), "bq0": pc(params["bq0"]).astype(f32),
        "wq1": prc(params["wq1"]).astype(bf16), "bq1": pc(params["bq1"]).astype(f32),
    }


# ----------------------------------------------------------------------------
# Wrapper
# ----------------------------------------------------------------------------
def deterministic_encoder(context_x, context_y, target_x, params, *, b_blk=None):
    B, n_ctx, x_dim = context_x.shape
    n_tgt = target_x.shape[1]
    y_dim = context_y.shape[-1]
    H = params["w2"].shape[-1]
    H_pad = _round_up(H, 128)
    assert n_ctx % 8 == 0 and n_tgt % 8 == 0, "sequence lengths must be multiples of 8"

    # Generation-aware batch blocking: one grid step per TensorCore.
    if b_blk is None:
        n_tc = _num_tensorcores()
        if n_tc <= 1 or B < 2:
            b_blk = max(B, 1)          # v5e/v6e: grid = 1, biggest possible M
        else:
            b_blk = -(-B // n_tc)      # v7x: grid = 2, one step per TensorCore
    B_pad = _round_up(B, b_blk)
    if B_pad != B:
        pad = [(0, B_pad - B), (0, 0), (0, 0)]
        context_x = jnp.pad(context_x, pad)
        context_y = jnp.pad(context_y, pad)
        target_x = jnp.pad(target_x, pad)

    # Host-side concat + flatten (contiguous) -> big-M 2-D tiles for the MLPs.
    cxy = jnp.concatenate([context_x, context_y], axis=-1).reshape(
        B_pad * n_ctx, x_dim + y_dim)
    tx = target_x.reshape(B_pad * n_tgt, x_dim)

    packed = _pack_params(params, y_dim, H_pad)
    ordered = [packed[n] for n in _PACKED_ORDER]

    seq_specs = [
        pl.BlockSpec((b_blk * n_ctx, x_dim + y_dim), lambda b: (b, 0)),
        pl.BlockSpec((b_blk * n_tgt, x_dim), lambda b: (b, 0)),
    ]
    # All packed params are 2-D and fully resident (constant block across the grid).
    param_specs = [pl.BlockSpec(p.shape, lambda b: (0, 0)) for p in ordered]

    # VMEM budget derived from actual block / param / intermediate sizes
    # (v7x only has 64 MiB physical VMEM per TC).
    Mc, Mt = b_blk * n_ctx, b_blk * n_tgt
    n_steps = B_pad // b_blk
    in_block = 4 * (Mc * (x_dim + y_dim) + Mt * x_dim)
    out_block = 4 * Mt * H_pad
    param_bytes = sum(p.size * p.dtype.itemsize for p in ordered)
    live = 4 * (2 * Mc * H_pad            # hx
                + 4 * Mc * H_pad          # h_val / d_enc / k intermediates
                + 3 * Mt * H_pad          # hq / q / out
                + 2 * b_blk * n_tgt * n_ctx)  # scores / attn
    vmem_limit = int(min(64 << 20,
                         max(16 << 20,
                             2 * (2 * (in_block + out_block) + 2 * param_bytes + live))))

    flops_per_step = 2 * (Mc * (x_dim + y_dim) * 2 * H_pad      # fused layer 0
                          + 3 * Mc * H_pad * H_pad              # value 1,2 + key 1
                          + Mt * x_dim * H_pad + Mt * H_pad * H_pad  # query 0,1
                          + 2 * b_blk * n_tgt * n_ctx * H_pad)  # attention
    bytes_accessed = (4 * (cxy.size + tx.size + B_pad * n_tgt * H_pad)
                      + param_bytes * n_steps)
    cost = pl.CostEstimate(flops=int(flops_per_step * n_steps),
                           transcendentals=int(B_pad * n_tgt * n_ctx),
                           bytes_accessed=int(bytes_accessed))

    kernel = partial(_det_encoder_kernel, b_blk=b_blk, n_ctx=n_ctx, n_tgt=n_tgt,
                     h_pad=H_pad, scale=1.0 / math.sqrt(H))

    out_flat = pl.pallas_call(
        kernel,
        out_shape=jax.ShapeDtypeStruct((B_pad * n_tgt, H_pad), jnp.float32),
        grid=(n_steps,),
        in_specs=seq_specs + param_specs,
        out_specs=pl.BlockSpec((b_blk * n_tgt, H_pad), lambda b: (b, 0)),
        compiler_params=pltpu.CompilerParams(
            dimension_semantics=("parallel",),
            vmem_limit_bytes=vmem_limit),
        cost_estimate=cost,
    )(cxy, tx, *ordered)

    return out_flat.reshape(B_pad, n_tgt, H_pad)[:B, :, :H]


# ----------------------------------------------------------------------------
# Deterministic synthetic parameter init (shapes implied by the module __init__).
# ----------------------------------------------------------------------------
def init_params(key, x_dim, y_dim, hidden_dim):
    in_dim = x_dim + y_dim
    shapes = {
        # _d_encoder = BatchMLP(input_dim, hidden_dim, num_layers=3)
        "w0": (in_dim, hidden_dim), "b0": (1, hidden_dim),
        "w1": (hidden_dim, hidden_dim), "b1": (1, hidden_dim),
        "w2": (hidden_dim, hidden_dim), "b2": (1, hidden_dim),
        # _cross_attention rep='mlp': batch_mlp_k = BatchMLP(x_dim, hidden_dim, 2)
        "wk0": (x_dim, hidden_dim), "bk0": (1, hidden_dim),
        "wk1": (hidden_dim, hidden_dim), "bk1": (1, hidden_dim),
        # batch_mlp_q = BatchMLP(x_dim, hidden_dim, 2)
        "wq0": (x_dim, hidden_dim), "bq0": (1, hidden_dim),
        "wq1": (hidden_dim, hidden_dim), "bq1": (1, hidden_dim),
    }
    params = {}
    keys = jax.random.split(key, len(shapes))
    for k_i, (name, shp) in zip(keys, shapes.items()):
        fan_in = shp[0] if name.startswith("w") else shp[-1]
        params[name] = jax.random.normal(k_i, shp, jnp.float32) / math.sqrt(fan_in)
    return params


# ----------------------------------------------------------------------------
# Pure-JAX f32 reference (mirrors the PyTorch forward) for correctness checking.
# ----------------------------------------------------------------------------
def reference(context_x, context_y, target_x, p):
    cxy = jnp.concatenate([context_x, context_y], axis=-1)
    h = jnp.maximum(cxy @ p["w0"] + p["b0"], 0.0)
    h = jnp.maximum(h @ p["w1"] + p["b1"], 0.0)
    d_enc = h @ p["w2"] + p["b2"]

    k = jnp.maximum(context_x @ p["wk0"] + p["bk0"], 0.0) @ p["wk1"] + p["bk1"]
    q = jnp.maximum(target_x @ p["wq0"] + p["bq0"], 0.0) @ p["wq1"] + p["bq1"]

    scores = jnp.einsum("bik,bjk->bij", q, k) / math.sqrt(q.shape[-1])
    w = jax.nn.softmax(scores, axis=-1)
    return jnp.einsum("bij,bjd->bid", w, d_enc)


if __name__ == "__main__":
    B, n_ctx, n_tgt = 8, 16, 16
    x_dim, y_dim, hidden_dim = 2, 1, 32

    key = jax.random.PRNGKey(0)
    k_cx, k_cy, k_tx, k_p = jax.random.split(key, 4)
    context_x = jax.random.normal(k_cx, (B, n_ctx, x_dim), jnp.float32)
    context_y = jax.random.normal(k_cy, (B, n_ctx, y_dim), jnp.float32)
    target_x = jax.random.normal(k_tx, (B, n_tgt, x_dim), jnp.float32)
    params = init_params(k_p, x_dim, y_dim, hidden_dim)

    out = deterministic_encoder(context_x, context_y, target_x, params)
    out = jax.block_until_ready(out)

    ref = reference(context_x, context_y, target_x, params)
    assert out.shape == (B, n_tgt, hidden_dim), out.shape
    # Tolerance accounts for bf16 MXU operands (f32 accumulation, f32 softmax);
    # the approx reciprocal was removed so bf16 rounding is the only deviation.
    assert jnp.allclose(out, ref, atol=3e-2, rtol=3e-2), float(jnp.abs(out - ref).max())

    print("KERNEL_OK")
</pallas_src>

<mosaic_0001>
module attributes {stable_mosaic.version = 11 : i64} {
  func.func @_det_encoder_kernel(%arg0: i32, %arg1: memref<128x3xf32, #tpu.memory_space<vmem>>, %arg2: memref<128x2xf32, #tpu.memory_space<vmem>>, %arg3: memref<3x256xbf16, #tpu.memory_space<vmem>>, %arg4: memref<1x256xf32, #tpu.memory_space<vmem>>, %arg5: memref<128x128xbf16, #tpu.memory_space<vmem>>, %arg6: memref<1x128xf32, #tpu.memory_space<vmem>>, %arg7: memref<128x128xbf16, #tpu.memory_space<vmem>>, %arg8: memref<1x128xf32, #tpu.memory_space<vmem>>, %arg9: memref<128x128xbf16, #tpu.memory_space<vmem>>, %arg10: memref<1x128xf32, #tpu.memory_space<vmem>>, %arg11: memref<2x128xbf16, #tpu.memory_space<vmem>>, %arg12: memref<1x128xf32, #tpu.memory_space<vmem>>, %arg13: memref<128x128xbf16, #tpu.memory_space<vmem>>, %arg14: memref<1x128xf32, #tpu.memory_space<vmem>>, %arg15: memref<128x128xf32, #tpu.memory_space<vmem>>) attributes {dimension_semantics = [#tpu.dimension_semantics<parallel>], iteration_bounds = array<i64: 1>, scalar_prefetch = 0 : i64, scratch_operands = 0 : i64, tpu.core_type = #tpu.core_type<tc>, window_params = [{transform_indices = @transform_0, window_bounds = array<i64: 128, 3>}, {transform_indices = @transform_1, window_bounds = array<i64: 128, 2>}, {pipeline_mode = #tpu.pipeline_mode<synchronous>, transform_indices = @transform_2, window_bounds = array<i64: 3, 256>}, {pipeline_mode = #tpu.pipeline_mode<synchronous>, transform_indices = @transform_3, window_bounds = array<i64: 1, 256>}, {pipeline_mode = #tpu.pipeline_mode<synchronous>, transform_indices = @transform_4, window_bounds = array<i64: 128, 128>}, {pipeline_mode = #tpu.pipeline_mode<synchronous>, transform_indices = @transform_5, window_bounds = array<i64: 1, 128>}, {pipeline_mode = #tpu.pipeline_mode<synchronous>, transform_indices = @transform_6, window_bounds = array<i64: 128, 128>}, {pipeline_mode = #tpu.pipeline_mode<synchronous>, transform_indices = @transform_7, window_bounds = array<i64: 1, 128>}, {pipeline_mode = #tpu.pipeline_mode<synchronous>, transform_indices = @transform_8, window_bounds = array<i64: 128, 128>}, {pipeline_mode = #tpu.pipeline_mode<synchronous>, transform_indices = @transform_9, window_bounds = array<i64: 1, 128>}, {pipeline_mode = #tpu.pipeline_mode<synchronous>, transform_indices = @transform_10, window_bounds = array<i64: 2, 128>}, {pipeline_mode = #tpu.pipeline_mode<synchronous>, transform_indices = @transform_11, window_bounds = array<i64: 1, 128>}, {pipeline_mode = #tpu.pipeline_mode<synchronous>, transform_indices = @transform_12, window_bounds = array<i64: 128, 128>}, {pipeline_mode = #tpu.pipeline_mode<synchronous>, transform_indices = @transform_13, window_bounds = array<i64: 1, 128>}, {transform_indices = @transform_14, window_bounds = array<i64: 128, 128>}]} {
    %c0 = arith.constant 0 : index
    %c0_0 = arith.constant 0 : index
    %0 = vector.load %arg1[%c0, %c0_0] : memref<128x3xf32, #tpu.memory_space<vmem>>, vector<128x3xf32>
    %1 = arith.truncf %0 : vector<128x3xf32> to vector<128x3xbf16>
    %c0_1 = arith.constant 0 : index
    %c0_2 = arith.constant 0 : index
    %2 = vector.load %arg2[%c0_1, %c0_2] : memref<128x2xf32, #tpu.memory_space<vmem>>, vector<128x2xf32>
    %3 = arith.truncf %2 : vector<128x2xf32> to vector<128x2xbf16>
    %c0_3 = arith.constant 0 : index
    %c0_4 = arith.constant 0 : index
    %4 = vector.load %arg3[%c0_3, %c0_4] : memref<3x256xbf16, #tpu.memory_space<vmem>>, vector<3x256xbf16>
    %cst = arith.constant dense<0.000000e+00> : vector<128x256xf32>
    %5 = tpu.matmul %1, %4, %cst {dimension_numbers = #tpu.dot_dimension_numbers<[1], [0], [0], [1], [0, 0, 1, 1], [], []>} : vector<128x3xbf16>, vector<3x256xbf16>, vector<128x256xf32> -> vector<128x256xf32>
    %c0_5 = arith.constant 0 : index
    %c0_6 = arith.constant 0 : index
    %6 = vector.load %arg4[%c0_5, %c0_6] : memref<1x256xf32, #tpu.memory_space<vmem>>, vector<1x256xf32>
    %7 = vector.broadcast %6 : vector<1x256xf32> to vector<128x256xf32>
    %8 = arith.addf %5, %7 : vector<128x256xf32>
    %9 = vector.extract_strided_slice %8 {offsets = [0, 0], sizes = [128, 128], strides = [1, 1]} : vector<128x256xf32> to vector<128x128xf32>
    %cst_7 = arith.constant 0.000000e+00 : f32
    %10 = vector.broadcast %cst_7 : f32 to vector<128x128xf32>
    %11 = arith.maximumf %9, %10 : vector<128x128xf32>
    %12 = arith.truncf %11 : vector<128x128xf32> to vector<128x128xbf16>
    %13 = vector.extract_strided_slice %8 {offsets = [0, 128], sizes = [128, 128], strides = [1, 1]} : vector<128x256xf32> to vector<128x128xf32>
    %cst_8 = arith.constant 0.000000e+00 : f32
    %14 = vector.broadcast %cst_8 : f32 to vector<128x128xf32>
    %15 = arith.maximumf %13, %14 : vector<128x128xf32>
    %16 = arith.truncf %15 : vector<128x128xf32> to vector<128x128xbf16>
    %c0_9 = arith.constant 0 : index
    %c0_10 = arith.constant 0 : index
    %17 = vector.load %arg5[%c0_9, %c0_10] : memref<128x128xbf16, #tpu.memory_space<vmem>>, vector<128x128xbf16>
    %cst_11 = arith.constant dense<0.000000e+00> : vector<128x128xf32>
    %18 = tpu.matmul %12, %17, %cst_11 {dimension_numbers = #tpu.dot_dimension_numbers<[1], [0], [0], [1], [0, 0, 1, 1], [], []>} : vector<128x128xbf16>, vector<128x128xbf16>, vector<128x128xf32> -> vector<128x128xf32>
    %c0_12 = arith.constant 0 : index
    %c0_13 = arith.constant 0 : index
    %19 = vector.load %arg6[%c0_12, %c0_13] : memref<1x128xf32, #tpu.memory_space<vmem>>, vector<1x128xf32>
    %20 = vector.broadcast %19 : vector<1x128xf32> to vector<128x128xf32>
    %21 = arith.addf %18, %20 : vector<128x128xf32>
    %cst_14 = arith.constant 0.000000e+00 : f32
    %22 = vector.broadcast %cst_14 : f32 to vector<128x128xf32>
    %23 = arith.maximumf %21, %22 : vector<128x128xf32>
    %24 = arith.truncf %23 : vector<128x128xf32> to vector<128x128xbf16>
    %c0_15 = arith.constant 0 : index
    %c0_16 = arith.constant 0 : index
    %25 = vector.load %arg7[%c0_15, %c0_16] : memref<128x128xbf16, #tpu.memory_space<vmem>>, vector<128x128xbf16>
    %cst_17 = arith.constant dense<0.000000e+00> : vector<128x128xf32>
    %26 = tpu.matmul %24, %25, %cst_17 {dimension_numbers = #tpu.dot_dimension_numbers<[1], [0], [0], [1], [0, 0, 1, 1], [], []>} : vector<128x128xbf16>, vector<128x128xbf16>, vector<128x128xf32> -> vector<128x128xf32>
    %c0_18 = arith.constant 0 : index
    %c0_19 = arith.constant 0 : index
    %27 = vector.load %arg8[%c0_18, %c0_19] : memref<1x128xf32, #tpu.memory_space<vmem>>, vector<1x128xf32>
    %28 = vector.broadcast %27 : vector<1x128xf32> to vector<128x128xf32>
    %29 = arith.addf %26, %28 : vector<128x128xf32>
    %30 = arith.truncf %29 : vector<128x128xf32> to vector<128x128xbf16>
    %c0_20 = arith.constant 0 : index
    %c0_21 = arith.constant 0 : index
    %31 = vector.load %arg9[%c0_20, %c0_21] : memref<128x128xbf16, #tpu.memory_space<vmem>>, vector<128x128xbf16>
    %cst_22 = arith.constant dense<0.000000e+00> : vector<128x128xf32>
    %32 = tpu.matmul %16, %31, %cst_22 {dimension_numbers = #tpu.dot_dimension_numbers<[1], [0], [0], [1], [0, 0, 1, 1], [], []>} : vector<128x128xbf16>, vector<128x128xbf16>, vector<128x128xf32> -> vector<128x128xf32>
    %c0_23 = arith.constant 0 : index
    %c0_24 = arith.constant 0 : index
    %33 = vector.load %arg10[%c0_23, %c0_24] : memref<1x128xf32, #tpu.memory_space<vmem>>, vector<1x128xf32>
    %34 = vector.broadcast %33 : vector<1x128xf32> to vector<128x128xf32>
    %35 = arith.addf %32, %34 : vector<128x128xf32>
    %36 = arith.truncf %35 : vector<128x128xf32> to vector<128x128xbf16>
    %c0_25 = arith.constant 0 : index
    %c0_26 = arith.constant 0 : index
    %37 = vector.load %arg11[%c0_25, %c0_26] : memref<2x128xbf16, #tpu.memory_space<vmem>>, vector<2x128xbf16>
    %cst_27 = arith.constant dense<0.000000e+00> : vector<128x128xf32>
    %38 = tpu.matmul %3, %37, %cst_27 {dimension_numbers = #tpu.dot_dimension_numbers<[1], [0], [0], [1], [0, 0, 1, 1], [], []>} : vector<128x2xbf16>, vector<2x128xbf16>, vector<128x128xf32> -> vector<128x128xf32>
    %c0_28 = arith.constant 0 : index
    %c0_29 = arith.constant 0 : index
    %39 = vector.load %arg12[%c0_28, %c0_29] : memref<1x128xf32, #tpu.memory_space<vmem>>, vector<1x128xf32>
    %40 = vector.broadcast %39 : vector<1x128xf32> to vector<128x128xf32>
    %41 = arith.addf %38, %40 : vector<128x128xf32>
    %cst_30 = arith.constant 0.000000e+00 : f32
    %42 = vector.broadcast %cst_30 : f32 to vector<128x128xf32>
    %43 = arith.maximumf %41, %42 : vector<128x128xf32>
    %44 = arith.truncf %43 : vector<128x128xf32> to vector<128x128xbf16>
    %c0_31 = arith.constant 0 : index
    %c0_32 = arith.constant 0 : index
    %45 = vector.load %arg13[%c0_31, %c0_32] : memref<128x128xbf16, #tpu.memory_space<vmem>>, vector<128x128xbf16>
    %cst_33 = arith.constant dense<0.000000e+00> : vector<128x128xf32>
    %46 = tpu.matmul %44, %45, %cst_33 {dimension_numbers = #tpu.dot_dimension_numbers<[1], [0], [0], [1], [0, 0, 1, 1], [], []>} : vector<128x128xbf16>, vector<128x128xbf16>, vector<128x128xf32> -> vector<128x128xf32>
    %c0_34 = arith.constant 0 : index
    %c0_35 = arith.constant 0 : index
    %47 = vector.load %arg14[%c0_34, %c0_35] : memref<1x128xf32, #tpu.memory_space<vmem>>, vector<1x128xf32>
    %48 = vector.broadcast %47 : vector<1x128xf32> to vector<128x128xf32>
    %49 = arith.addf %46, %48 : vector<128x128xf32>
    %50 = arith.truncf %49 : vector<128x128xf32> to vector<128x128xbf16>
    %51 = vector.shape_cast %30 : vector<128x128xbf16> to vector<8x16x128xbf16>
    %52 = vector.shape_cast %36 : vector<128x128xbf16> to vector<8x16x128xbf16>
    %53 = vector.shape_cast %50 : vector<128x128xbf16> to vector<8x16x128xbf16>
    "tpu.trace_start"() <{level = 10 : i32, message = "bqd,bkd->bqk"}> : () -> ()
    %cst_36 = arith.constant dense<0.000000e+00> : vector<8x16x16xf32>
    %54 = tpu.matmul %53, %52, %cst_36 {dimension_numbers = #tpu.dot_dimension_numbers<[2], [2], [1], [1], [0, 0, 0, 1, 1, 1], [0], [0]>} : vector<8x16x128xbf16>, vector<8x16x128xbf16>, vector<8x16x16xf32> -> vector<8x16x16xf32>
    "tpu.trace_stop"() : () -> ()
    %cst_37 = arith.constant 0.176776692 : f32
    %55 = vector.broadcast %cst_37 : f32 to vector<8x16x16xf32>
    %56 = arith.mulf %54, %55 : vector<8x16x16xf32>
    %cst_38 = arith.constant dense<0xFF800000> : vector<8x16xf32>
    %57 = vector.multi_reduction <maximumf>, %56, %cst_38 [2] : vector<8x16x16xf32> to vector<8x16xf32>
    %58 = vector.shape_cast %57 : vector<8x16xf32> to vector<8x16x1xf32>
    %59 = vector.broadcast %58 : vector<8x16x1xf32> to vector<8x16x16xf32>
    %60 = arith.subf %56, %59 : vector<8x16x16xf32>
    %61 = math.exp %60 : vector<8x16x16xf32>
    %cst_39 = arith.constant dense<0.000000e+00> : vector<8x16xf32>
    %62 = vector.multi_reduction <add>, %61, %cst_39 [2] : vector<8x16x16xf32> to vector<8x16xf32>
    %63 = vector.shape_cast %62 : vector<8x16xf32> to vector<8x16x1xf32>
    %64 = vector.broadcast %63 : vector<8x16x1xf32> to vector<8x16x16xf32>
    %65 = arith.divf %61, %64 : vector<8x16x16xf32>
    %66 = arith.truncf %65 : vector<8x16x16xf32> to vector<8x16x16xbf16>
    "tpu.trace_start"() <{level = 10 : i32, message = "bqk,bkd->bqd"}> : () -> ()
    %cst_40 = arith.constant dense<0.000000e+00> : vector<8x16x128xf32>
    %67 = tpu.matmul %66, %51, %cst_40 {dimension_numbers = #tpu.dot_dimension_numbers<[2], [1], [1], [2], [0, 0, 0, 1, 1, 2], [0], [0]>} : vector<8x16x16xbf16>, vector<8x16x128xbf16>, vector<8x16x128xf32> -> vector<8x16x128xf32>
    "tpu.trace_stop"() : () -> ()
    %68 = vector.shape_cast %67 : vector<8x16x128xf32> to vector<128x128xf32>
    %c0_41 = arith.constant 0 : index
    %c0_42 = arith.constant 0 : index
    %69 = vector.load %arg15[%c0_41, %c0_42] : memref<128x128xf32, #tpu.memory_space<vmem>>, vector<128x128xf32>
    tpu.vector_store %arg15[%c0_41, %c0_42], %68 {strides = array<i32>} : memref<128x128xf32, #tpu.memory_space<vmem>>, vector<128x128xf32>,
    return
  }
  func.func @transform_0(%arg0: i32) -> (i32, i32) {
    %c0_i32 = arith.constant 0 : i32
    %c0_i32_0 = arith.constant 0 : i32
    return %arg0, %c0_i32 : i32, i32
  }
  func.func @transform_1(%arg0: i32) -> (i32, i32) {
    %c0_i32 = arith.constant 0 : i32
    %c0_i32_0 = arith.constant 0 : i32
    return %arg0, %c0_i32 : i32, i32
  }
  func.func @transform_2(%arg0: i32) -> (i32, i32) {
    %c0_i32 = arith.constant 0 : i32
    %c0_i32_0 = arith.constant 0 : i32
    %c0_i32_1 = arith.constant 0 : i32
    return %c0_i32, %c0_i32_0 : i32, i32
  }
  func.func @transform_3(%arg0: i32) -> (i32, i32) {
    %c0_i32 = arith.constant 0 : i32
    %c0_i32_0 = arith.constant 0 : i32
    %c0_i32_1 = arith.constant 0 : i32
    return %c0_i32, %c0_i32_0 : i32, i32
  }
  func.func @transform_4(%arg0: i32) -> (i32, i32) {
    %c0_i32 = arith.constant 0 : i32
    %c0_i32_0 = arith.constant 0 : i32
    %c0_i32_1 = arith.constant 0 : i32
    return %c0_i32, %c0_i32_0 : i32, i32
  }
  func.func @transform_5(%arg0: i32) -> (i32, i32) {
    %c0_i32 = arith.constant 0 : i32
    %c0_i32_0 = arith.constant 0 : i32
    %c0_i32_1 = arith.constant 0 : i32
    return %c0_i32, %c0_i32_0 : i32, i32
  }
  func.func @transform_6(%arg0: i32) -> (i32, i32) {
    %c0_i32 = arith.constant 0 : i32
    %c0_i32_0 = arith.constant 0 : i32
    %c0_i32_1 = arith.constant 0 : i32
    return %c0_i32, %c0_i32_0 : i32, i32
  }
  func.func @transform_7(%arg0: i32) -> (i32, i32) {
    %c0_i32 = arith.constant 0 : i32
    %c0_i32_0 = arith.constant 0 : i32
    %c0_i32_1 = arith.constant 0 : i32
    return %c0_i32, %c0_i32_0 : i32, i32
  }
  func.func @transform_8(%arg0: i32) -> (i32, i32) {
    %c0_i32 = arith.constant 0 : i32
    %c0_i32_0 = arith.constant 0 : i32
    %c0_i32_1 = arith.constant 0 : i32
    return %c0_i32, %c0_i32_0 : i32, i32
  }
  func.func @transform_9(%arg0: i32) -> (i32, i32) {
    %c0_i32 = arith.constant 0 : i32
    %c0_i32_0 = arith.constant 0 : i32
    %c0_i32_1 = arith.constant 0 : i32
    return %c0_i32, %c0_i32_0 : i32, i32
  }
  func.func @transform_10(%arg0: i32) -> (i32, i32) {
    %c0_i32 = arith.constant 0 : i32
    %c0_i32_0 = arith.constant 0 : i32
    %c0_i32_1 = arith.constant 0 : i32
    return %c0_i32, %c0_i32_0 : i32, i32
  }
  func.func @transform_11(%arg0: i32) -> (i32, i32) {
    %c0_i32 = arith.constant 0 : i32
    %c0_i32_0 = arith.constant 0 : i32
    %c0_i32_1 = arith.constant 0 : i32
    return %c0_i32, %c0_i32_0 : i32, i32
  }
  func.func @transform_12(%arg0: i32) -> (i32, i32) {
    %c0_i32 = arith.constant 0 : i32
    %c0_i32_0 = arith.constant 0 : i32
    %c0_i32_1 = arith.constant 0 : i32
    return %c0_i32, %c0_i32_0 : i32, i32
  }
  func.func @transform_13(%arg0: i32) -> (i32, i32) {
    %c0_i32 = arith.constant 0 : i32
    %c0_i32_0 = arith.constant 0 : i32
    %c0_i32_1 = arith.constant 0 : i32
    return %c0_i32, %c0_i32_0 : i32, i32
  }
  func.func @transform_14(%arg0: i32) -> (i32, i32) {
    %c0_i32 = arith.constant 0 : i32
    %c0_i32_0 = arith.constant 0 : i32
    return %arg0, %c0_i32 : i32, i32
  }
}

</mosaic_0001>

<llo_original>
// kernel: tpu_custom_call.1
$region0: #{tpu_custom_call.1}
  #allocation0 [shape = 'u32[]', space=smem, size = 0x4, offset = 0x4, fixed_abs, tag = 'smem constant byte address 0x4 - core index']
  #allocation1 [shape = 'u32[144,128]{1,0:T(1,128)}', space=vmem, size = 0x12000, scoped, tag = 'internal scratch']
  %s0 = inlined_call_operand.vmem [shape: f32[128,3], index: 0, kind: input, shape index: {}]
  %s1 = inlined_call_operand.vmem [shape: f32[128,2], index: 1, kind: input, shape index: {}]
  %s2 = inlined_call_operand.vmem [shape: bf16[3,256], index: 2, kind: input, shape index: {}]
  %s3 = inlined_call_operand.vmem [shape: f32[1,256], index: 3, kind: input, shape index: {}]
  %s4 = inlined_call_operand.vmem [shape: bf16[128,128], index: 4, kind: input, shape index: {}]
  %s5 = inlined_call_operand.vmem [shape: f32[1,128], index: 5, kind: input, shape index: {}]
  %s6 = inlined_call_operand.vmem [shape: bf16[128,128], index: 6, kind: input, shape index: {}]
  %s7 = inlined_call_operand.vmem [shape: f32[1,128], index: 7, kind: input, shape index: {}]
  %s8 = inlined_call_operand.vmem [shape: bf16[128,128], index: 8, kind: input, shape index: {}]
  %s9 = inlined_call_operand.vmem [shape: f32[1,128], index: 9, kind: input, shape index: {}]
  %s10 = inlined_call_operand.vmem [shape: bf16[2,128], index: 10, kind: input, shape index: {}]
  %s11 = inlined_call_operand.vmem [shape: f32[1,128], index: 11, kind: input, shape index: {}]
  %s12 = inlined_call_operand.vmem [shape: bf16[128,128], index: 12, kind: input, shape index: {}]
  %s13 = inlined_call_operand.vmem [shape: f32[1,128], index: 13, kind: input, shape index: {}]
  %s14 = inlined_call_operand.hbm [shape: f32[128,128], index: 14, kind: output, shape index: {}]
  %s15 = sld [smem:[#allocation0]]
  $region66: #{tpu_custom_call.1} parent=0
    _
  %s17 = ssub.s32 1, %s15
  %s18 = scalar_select 0, %s17, %s15
  $region1: #{tpu_custom_call.1} parent=0
    #allocation2 [shape = 'u8[65536]{0}', space=vmem, size = 0x10000, scoped, tag = 'output window, operand 0, single buffered']
    #allocation3 [shape = 's32[1]{0}', space=sflag, size = 0x4, scoped, tag = 'scoped memory for tpu_custom_call.1']
    %19 = vsyncpa [#allocation3], 0
    // Predicated region
    $region2: #{tpu_custom_call.1} parent=1 // pred_check
      _
    $region3: #{tpu_custom_call.1} parent=1 // pred_check_branch
      %21 = sbr.rel (0) target = $region5
    $region4: #{tpu_custom_call.1} parent=1 // pred_region
      _
    $region5: #{tpu_custom_call.1} parent=1 // pred_fallthru
      _
    // Predicated region
    $region6: #{tpu_custom_call.1} parent=1 // pred_check
      _
    $region7: #{tpu_custom_call.1} parent=1 // pred_check_branch
      %23 = sbr.rel (0) target = $region9
    $region8: #{tpu_custom_call.1} parent=1 // pred_region
      _
    $region9: #{tpu_custom_call.1} parent=1 // pred_fallthru
      _
    // Predicated region
    $region10: #{tpu_custom_call.1} parent=1 // pred_check
      _
    $region11: #{tpu_custom_call.1} parent=1 // pred_check_branch
      %25 = sbr.rel (0) target = $region13
    $region12: #{tpu_custom_call.1} parent=1 // pred_region
      _
    $region13: #{tpu_custom_call.1} parent=1 // pred_fallthru
      _
    // Predicated region
    $region14: #{tpu_custom_call.1} parent=1 // pred_check
      _
    $region15: #{tpu_custom_call.1} parent=1 // pred_check_branch
      %27 = sbr.rel (0) target = $region17
    $region16: #{tpu_custom_call.1} parent=1 // pred_region
      _
    $region17: #{tpu_custom_call.1} parent=1 // pred_fallthru
      _
    // Predicated region
    $region18: #{tpu_custom_call.1} parent=1 // pred_check
      _
    $region19: #{tpu_custom_call.1} parent=1 // pred_check_branch
      %29 = sbr.rel (0) target = $region21
    $region20: #{tpu_custom_call.1} parent=1 // pred_region
      _
    $region21: #{tpu_custom_call.1} parent=1 // pred_fallthru
      _
    // Predicated region
    $region22: #{tpu_custom_call.1} parent=1 // pred_check
      _
    $region23: #{tpu_custom_call.1} parent=1 // pred_check_branch
      %31 = sbr.rel (0) target = $region25
    $region24: #{tpu_custom_call.1} parent=1 // pred_region
      _
    $region25: #{tpu_custom_call.1} parent=1 // pred_fallthru
      _
    // Predicated region
    $region26: #{tpu_custom_call.1} parent=1 // pred_check
      _
    $region27: #{tpu_custom_call.1} parent=1 // pred_check_branch
      %33 = sbr.rel (0) target = $region29
    $region28: #{tpu_custom_call.1} parent=1 // pred_region
      _
    $region29: #{tpu_custom_call.1} parent=1 // pred_fallthru
      _
    // Predicated region
    $region30: #{tpu_custom_call.1} parent=1 // pred_check
      _
    $region31: #{tpu_custom_call.1} parent=1 // pred_check_branch
      %35 = sbr.rel (0) target = $region33
    $region32: #{tpu_custom_call.1} parent=1 // pred_region
      _
    $region33: #{tpu_custom_call.1} parent=1 // pred_fallthru
      _
    // Predicated region
    $region34: #{tpu_custom_call.1} parent=1 // pred_check
      _
    $region35: #{tpu_custom_call.1} parent=1 // pred_check_branch
      %37 = sbr.rel (0) target = $region37
    $region36: #{tpu_custom_call.1} parent=1 // pred_region
      _
    $region37: #{tpu_custom_call.1} parent=1 // pred_fallthru
      _
    // Predicated region
    $region38: #{tpu_custom_call.1} parent=1 // pred_check
      _
    $region39: #{tpu_custom_call.1} parent=1 // pred_check_branch
      %39 = sbr.rel (0) target = $region41
    $region40: #{tpu_custom_call.1} parent=1 // pred_region
      _
    $region41: #{tpu_custom_call.1} parent=1 // pred_fallthru
      _
    // Predicated region
    $region42: #{tpu_custom_call.1} parent=1 // pred_check
      _
    $region43: #{tpu_custom_call.1} parent=1 // pred_check_branch
      %41 = sbr.rel (0) target = $region45
    $region44: #{tpu_custom_call.1} parent=1 // pred_region
      _
    $region45: #{tpu_custom_call.1} parent=1 // pred_fallthru
      _
    // Predicated region
    $region46: #{tpu_custom_call.1} parent=1 // pred_check
      _
    $region47: #{tpu_custom_call.1} parent=1 // pred_check_branch
      %43 = sbr.rel (0) target = $region49
    $region48: #{tpu_custom_call.1} parent=1 // pred_region
      _
    $region49: #{tpu_custom_call.1} parent=1 // pred_fallthru
      _
    // Predicated region
    $region50: #{tpu_custom_call.1} parent=1 // pred_check
      _
    $region51: #{tpu_custom_call.1} parent=1 // pred_check_branch
      %45 = sbr.rel (0) target = $region53
    $region52: #{tpu_custom_call.1} parent=1 // pred_region
      _
    $region53: #{tpu_custom_call.1} parent=1 // pred_fallthru
      _
    // Predicated region
    $region54: #{tpu_custom_call.1} parent=1 // pred_check
      _
    $region55: #{tpu_custom_call.1} parent=1 // pred_check_branch
      %47 = sbr.rel (0) target = $region57
    $region56: #{tpu_custom_call.1} parent=1 // pred_region
      _
    $region57: #{tpu_custom_call.1} parent=1 // pred_fallthru
      _
    %v49 = vld [vmem:[%s0] sm:$0xff]
    %v50 = vld [vmem:[%s0 + $0x8] sm:$0xff]
    %v51 = vld [vmem:[%s0 + $0x10] sm:$0xff]
    %v52 = vld [vmem:[%s0 + $0x18] sm:$0xff]
    %v53 = vld [vmem:[%s0 + $0x20] sm:$0xff]
    %v54 = vld [vmem:[%s0 + $0x28] sm:$0xff]
    %v55 = vld [vmem:[%s0 + $0x30] sm:$0xff]
    %v56 = vld [vmem:[%s0 + $0x38] sm:$0xff]
    %v57 = vld [vmem:[%s0 + $0x40] sm:$0xff]
    %v58 = vld [vmem:[%s0 + $0x48] sm:$0xff]
    %v59 = vld [vmem:[%s0 + $0x50] sm:$0xff]
    %v60 = vld [vmem:[%s0 + $0x58] sm:$0xff]
    %v61 = vld [vmem:[%s0 + $0x60] sm:$0xff]
    %v62 = vld [vmem:[%s0 + $0x68] sm:$0xff]
    %v63 = vld [vmem:[%s0 + $0x70] sm:$0xff]
    %v64 = vld [vmem:[%s0 + $0x78] sm:$0xff]
    %v65 = vpack.c.bf16 %v50, %v49
    %v66 = vpack.c.bf16 %v52, %v51
    %v67 = vpack.c.bf16 %v54, %v53
    %v68 = vpack.c.bf16 %v56, %v55
    %v69 = vpack.c.bf16 %v58, %v57
    %v70 = vpack.c.bf16 %v60, %v59
    %v71 = vpack.c.bf16 %v62, %v61
    %v72 = vpack.c.bf16 %v64, %v63
    %v73 = vld [vmem:[%s1] sm:$0xff]
    %v74 = vld [vmem:[%s1 + $0x8] sm:$0xff]
    %v75 = vld [vmem:[%s1 + $0x10] sm:$0xff]
    %v76 = vld [vmem:[%s1 + $0x18] sm:$0xff]
    %v77 = vld [vmem:[%s1 + $0x20] sm:$0xff]
    %v78 = vld [vmem:[%s1 + $0x28] sm:$0xff]
    %v79 = vld [vmem:[%s1 + $0x30] sm:$0xff]
    %v80 = vld [vmem:[%s1 + $0x38] sm:$0xff]
    %v81 = vld [vmem:[%s1 + $0x40] sm:$0xff]
    %v82 = vld [vmem:[%s1 + $0x48] sm:$0xff]
    %v83 = vld [vmem:[%s1 + $0x50] sm:$0xff]
    %v84 = vld [vmem:[%s1 + $0x58] sm:$0xff]
    %v85 = vld [vmem:[%s1 + $0x60] sm:$0xff]
    %v86 = vld [vmem:[%s1 + $0x68] sm:$0xff]
    %v87 = vld [vmem:[%s1 + $0x70] sm:$0xff]
    %v88 = vld [vmem:[%s1 + $0x78] sm:$0xff]
    %v89 = vpack.c.bf16 %v74, %v73
    %v90 = vpack.c.bf16 %v76, %v75
    %v91 = vpack.c.bf16 %v78, %v77
    %v92 = vpack.c.bf16 %v80, %v79
    %v93 = vpack.c.bf16 %v82, %v81
    %v94 = vpack.c.bf16 %v84, %v83
    %v95 = vpack.c.bf16 %v86, %v85
    %v96 = vpack.c.bf16 %v88, %v87
    %v97 = vld [vmem:[%s2] sm:$0xf]
    %v98 = vld [vmem:[%s3] sm:$0x3]
    %v100 = vlaneseq
    %v101 = vshrl.u32 %v100, 7
    %v102 = vsub.s32 0, %v101
    %v103 = vrot.slane %v98, %v102
    %v104 = vlaneseq
    %v105 = vshrl.u32 %v104, 7
    %v106 = vsub.s32 1, %v105
    %v107 = vrot.slane %v98, %v106
    %v112 = vunpack.c.l.s4 1983009808
    %v113 = vunpack.c.0.s8 %v112
    %v114 = vlaneseq
    %v115 = vshrl.u32 %v114, 7
    %v116 = vsub.s32 %v113, %v115
    %v117 = vrot.slane %v97, %v116
    %v118 = vcombine.high %v117, %v117
    %vm119 = vcmask 23552
    %v121 = vsel %vm119, %v65, 0
    %v124 = vsel %vm119, %v66, 0
    %v127 = vsel %vm119, %v67, 0
    %v130 = vsel %vm119, %v68, 0
    %v133 = vsel %vm119, %v69, 0
    %v136 = vsel %vm119, %v70, 0
    %v139 = vsel %vm119, %v71, 0
    %v142 = vsel %vm119, %v72, 0
    %vm144 = vcmask 1040384
    %vm145 = vcmask 1041408
    %v146 = vsel %vm144, 4294967295, 65535
    %v147 = vsel %vm145, %v146, 0
    %v149 = vand.u32 %v117, %v147
    %v152 = vand.u32 %v118, %v147
    %154 = vmatprep.subr.bf16.mxu0 %v152
    %155 = vmatpush1.bf16.msra.mxu0 %v149
    %156 = vmatprep.subr.bf16.mxu0 0
    %157 = vmatpush1.bf16.msra.mxu0 0
    %158 = vmatprep.subr.bf16.mxu0 0
    %159 = vmatpush1.bf16.msra.mxu0 0
    %160 = vmatprep.subr.bf16.mxu0 0
    %161 = vmatpush1.bf16.msra.mxu0 0
    %162 = vmatprep.subr.bf16.mxu0 0
    %163 = vmatpush1.bf16.msra.mxu0 0
    %164 = vmatprep.subr.bf16.mxu0 0
    %165 = vmatpush1.bf16.msra.mxu0 0
    %166 = vmatprep.subr.bf16.mxu0 0
    %167 = vmatpush1.bf16.msra.mxu0 0
    %168 = vmatprep.subr.bf16.mxu0 0
    %169 = vmatpush1.bf16.msra.mxu0 0
    %170 = vmatprep.subr.bf16.mxu0 0
    %171 = vmatpush1.bf16.msra.mxu0 0
    %172 = vmatprep.subr.bf16.mxu0 0
    %173 = vmatpush1.bf16.msra.mxu0 0
    %174 = vmatprep.subr.bf16.mxu0 0
    %175 = vmatpush1.bf16.msra.mxu0 0
    %176 = vmatprep.subr.bf16.mxu0 0
    %177 = vmatpush1.bf16.msra.mxu0 0
    %178 = vmatprep.subr.bf16.mxu0 0
    %179 = vmatpush1.bf16.msra.mxu0 0
    %180 = vmatprep.subr.bf16.mxu0 0
    %181 = vmatpush1.bf16.msra.mxu0 0
    %182 = vmatprep.subr.bf16.mxu0 0
    %183 = vmatpush1.bf16.msra.mxu0 0
    %184 = vmatprep.subr.bf16.mxu0 0
    %185 = vmatpush1.bf16.msra.mxu0 0
    %186 = vmatprep.mubr.bf16.mxu0 0
    %187 = vmatmul.mubr.bf16.gmra.mrb[0].mxu0 %v121
    %v188 = vpop.f32.mrb[0].mxu0
    %v189 = vadd.f32 %v103, %v188
    %v190 = vpop.f32.mrb[0].mxu0
    %v191 = vadd.f32 %v107, %v190
    %v192 = vpop.f32.mrb[0].mxu0
    %v193 = vadd.f32 %v103, %v192
    %v194 = vpop.f32.mrb[0].mxu0
    %v195 = vadd.f32 %v107, %v194
    %196 = vmatprep.mubr.bf16.mxu0 0
    %197 = vmatmul.mubr.bf16.gmra.mrb[0].mxu0 %v124
    %v198 = vpop.f32.mrb[0].mxu0
    %v199 = vadd.f32 %v103, %v198
    %v200 = vpop.f32.mrb[0].mxu0
    %v201 = vadd.f32 %v107, %v200
    %v202 = vpop.f32.mrb[0].mxu0
    %v203 = vadd.f32 %v103, %v202
    %v204 = vpop.f32.mrb[0].mxu0
    %v205 = vadd.f32 %v107, %v204
    %206 = vmatprep.mubr.bf16.mxu0 0
    %207 = vmatmul.mubr.bf16.gmra.mrb[0].mxu0 %v127
    %v208 = vpop.f32.mrb[0].mxu0
    %v209 = vadd.f32 %v103, %v208
    %v210 = vpop.f32.mrb[0].mxu0
    %v211 = vadd.f32 %v107, %v210
    %v212 = vpop.f32.mrb[0].mxu0
    %v213 = vadd.f32 %v103, %v212
    %v214 = vpop.f32.mrb[0].mxu0
    %v215 = vadd.f32 %v107, %v214
    %216 = vmatprep.mubr.bf16.mxu0 0
    %217 = vmatmul.mubr.bf16.gmra.mrb[0].mxu0 %v130
    %v218 = vpop.f32.mrb[0].mxu0
    %v219 = vadd.f32 %v103, %v218
    %v220 = vpop.f32.mrb[0].mxu0
    %v221 = vadd.f32 %v107, %v220
    %v222 = vpop.f32.mrb[0].mxu0
    %v223 = vadd.f32 %v103, %v222
    %v224 = vpop.f32.mrb[0].mxu0
    %v225 = vadd.f32 %v107, %v224
    %226 = vmatprep.mubr.bf16.mxu0 0
    %227 = vmatmul.mubr.bf16.gmra.mrb[0].mxu0 %v133
    %v228 = vpop.f32.mrb[0].mxu0
    %v229 = vadd.f32 %v103, %v228
    %v230 = vpop.f32.mrb[0].mxu0
    %v231 = vadd.f32 %v107, %v230
    %v232 = vpop.f32.mrb[0].mxu0
    %v233 = vadd.f32 %v103, %v232
    %v234 = vpop.f32.mrb[0].mxu0
    %v235 = vadd.f32 %v107, %v234
    %236 = vmatprep.mubr.bf16.mxu0 0
    %237 = vmatmul.mubr.bf16.gmra.mrb[0].mxu0 %v136
    %v238 = vpop.f32.mrb[0].mxu0
    %v239 = vadd.f32 %v103, %v238
    %v240 = vpop.f32.mrb[0].mxu0
    %v241 = vadd.f32 %v107, %v240
    %v242 = vpop.f32.mrb[0].mxu0
    %v243 = vadd.f32 %v103, %v242
    %v244 = vpop.f32.mrb[0].mxu0
    %v245 = vadd.f32 %v107, %v244
    %246 = vmatprep.mubr.bf16.mxu0 0
    %247 = vmatmul.mubr.bf16.gmra.mrb[0].mxu0 %v139
    %v248 = vpop.f32.mrb[0].mxu0
    %v249 = vadd.f32 %v103, %v248
    %v250 = vpop.f32.mrb[0].mxu0
    %v251 = vadd.f32 %v107, %v250
    %v252 = vpop.f32.mrb[0].mxu0
    %v253 = vadd.f32 %v103, %v252
    %v254 = vpop.f32.mrb[0].mxu0
    %v255 = vadd.f32 %v107, %v254
    %256 = vmatprep.mubr.bf16.mxu0 0
    %257 = vmatmul.mubr.bf16.gmra.mrb[0].mxu0 %v142
    %v258 = vpop.f32.mrb[0].mxu0
    %v259 = vadd.f32 %v103, %v258
    %v260 = vpop.f32.mrb[0].mxu0
    %v261 = vadd.f32 %v107, %v260
    %v262 = vpop.f32.mrb[0].mxu0
    %v263 = vadd.f32 %v103, %v262
    %v264 = vpop.f32.mrb[0].mxu0
    %v265 = vadd.f32 %v107, %v264
    %266 = vdwg.mxu0
    %v267 = vmax.f32 %v189, 0.0
    %v268 = vmax.f32 %v193, 0.0
    %v269 = vmax.f32 %v199, 0.0
    %v270 = vmax.f32 %v203, 0.0
    %v271 = vmax.f32 %v209, 0.0
    %v272 = vmax.f32 %v213, 0.0
    %v273 = vmax.f32 %v219, 0.0
    %v274 = vmax.f32 %v223, 0.0
    %v275 = vmax.f32 %v229, 0.0
    %v276 = vmax.f32 %v233, 0.0
    %v277 = vmax.f32 %v239, 0.0
    %v278 = vmax.f32 %v243, 0.0
    %v279 = vmax.f32 %v249, 0.0
    %v280 = vmax.f32 %v253, 0.0
    %v281 = vmax.f32 %v259, 0.0
    %v282 = vmax.f32 %v263, 0.0
    %v283 = vpack.c.bf16 %v268, %v267
    %v284 = vpack.c.bf16 %v270, %v269
    %v285 = vpack.c.bf16 %v272, %v271
    %v286 = vpack.c.bf16 %v274, %v273
    %v287 = vpack.c.bf16 %v276, %v275
    %v288 = vpack.c.bf16 %v278, %v277
    %v289 = vpack.c.bf16 %v280, %v279
    %v290 = vpack.c.bf16 %v282, %v281
    %v291 = vmax.f32 %v191, 0.0
    %v292 = vmax.f32 %v195, 0.0
    %v293 = vmax.f32 %v201, 0.0
    %v294 = vmax.f32 %v205, 0.0
    %v295 = vmax.f32 %v211, 0.0
    %v296 = vmax.f32 %v215, 0.0
    %v297 = vmax.f32 %v221, 0.0
    %v298 = vmax.f32 %v225, 0.0
    %v299 = vmax.f32 %v231, 0.0
    %v300 = vmax.f32 %v235, 0.0
    %v301 = vmax.f32 %v241, 0.0
    %v302 = vmax.f32 %v245, 0.0
    %v303 = vmax.f32 %v251, 0.0
    %v304 = vmax.f32 %v255, 0.0
    %v305 = vmax.f32 %v261, 0.0
    %v306 = vmax.f32 %v265, 0.0
    %v307 = vpack.c.bf16 %v292, %v291
    %v308 = vpack.c.bf16 %v294, %v293
    %v309 = vpack.c.bf16 %v296, %v295
    %v310 = vpack.c.bf16 %v298, %v297
    %v311 = vpack.c.bf16 %v300, %v299
    %v312 = vpack.c.bf16 %v302, %v301
    %v313 = vpack.c.bf16 %v304, %v303
    %v314 = vpack.c.bf16 %v306, %v305
    %v315 = vld [vmem:[%s4] sm:$0xf]
    %v316 = vld [vmem:[%s4 + $0x4] sm:$0xf]
    %v317 = vld [vmem:[%s4 + $0x8] sm:$0xf]
    %v318 = vld [vmem:[%s4 + $0xc] sm:$0xf]
    %v319 = vld [vmem:[%s4 + $0x10] sm:$0xf]
    %v320 = vld [vmem:[%s4 + $0x14] sm:$0xf]
    %v321 = vld [vmem:[%s4 + $0x18] sm:$0xf]
    %v322 = vld [vmem:[%s4 + $0x1c] sm:$0xf]
    %v323 = vld [vmem:[%s4 + $0x20] sm:$0xf]
    %v324 = vld [vmem:[%s4 + $0x24] sm:$0xf]
    %v325 = vld [vmem:[%s4 + $0x28] sm:$0xf]
    %v326 = vld [vmem:[%s4 + $0x2c] sm:$0xf]
    %v327 = vld [vmem:[%s4 + $0x30] sm:$0xf]
    %v328 = vld [vmem:[%s4 + $0x34] sm:$0xf]
    %v329 = vld [vmem:[%s4 + $0x38] sm:$0xf]
    %v330 = vld [vmem:[%s4 + $0x3c] sm:$0xf]
    %v331 = vld [vmem:[%s5] sm:$0x1]
    %v333 = vlaneseq
    %v334 = vshrl.u32 %v333, 7
    %v335 = vsub.s32 0, %v334
    %v336 = vrot.slane %v331, %v335
    %v354 = vunpack.c.l.b16 %v315
    %v355 = vunpack.c.l.b16 %v316
    %v356 = vunpack.c.l.b16 %v317
    %v357 = vunpack.c.l.b16 %v318
    %v358 = vunpack.c.l.b16 %v319
    %v359 = vunpack.c.l.b16 %v320
    %v360 = vunpack.c.l.b16 %v321
    %v361 = vunpack.c.l.b16 %v322
    %v362 = vunpack.c.l.b16 %v323
    %v363 = vunpack.c.l.b16 %v324
    %v364 = vunpack.c.l.b16 %v325
    %v365 = vunpack.c.l.b16 %v326
    %v366 = vunpack.c.l.b16 %v327
    %v367 = vunpack.c.l.b16 %v328
    %v368 = vunpack.c.l.b16 %v329
    %v369 = vunpack.c.l.b16 %v330
    %v370 = vpack.c.b16 %v355, %v354
    %v371 = vpack.c.b16 %v357, %v356
    %v372 = vpack.c.b16 %v359, %v358
    %v373 = vpack.c.b16 %v361, %v360
    %v374 = vpack.c.b16 %v363, %v362
    %v375 = vpack.c.b16 %v365, %v364
    %v376 = vpack.c.b16 %v367, %v366
    %v377 = vpack.c.b16 %v369, %v368
    %386 = vmatprep.subr.bf16.mxu0 0
    %387 = vmatpush1.bf16.msra.mxu0 %v370
    %388 = vmatprep.subr.bf16.mxu0 0
    %389 = vmatpush1.bf16.msra.mxu0 %v371
    %390 = vmatprep.subr.bf16.mxu0 0
    %391 = vmatpush1.bf16.msra.mxu0 %v372
    %392 = vmatprep.subr.bf16.mxu0 0
    %393 = vmatpush1.bf16.msra.mxu0 %v373
    %394 = vmatprep.subr.bf16.mxu0 0
    %395 = vmatpush1.bf16.msra.mxu0 %v374
    %396 = vmatprep.subr.bf16.mxu0 0
    %397 = vmatpush1.bf16.msra.mxu0 %v375
    %398 = vmatprep.subr.bf16.mxu0 0
    %399 = vmatpush1.bf16.msra.mxu0 %v376
    %400 = vmatprep.subr.bf16.mxu0 0
    %401 = vmatpush1.bf16.msra.mxu0 %v377
    %402 = vmatprep.subr.bf16.mxu0 0
    %403 = vmatpush1.bf16.msra.mxu0 0
    %404 = vmatprep.subr.bf16.mxu0 0
    %405 = vmatpush1.bf16.msra.mxu0 0
    %406 = vmatprep.subr.bf16.mxu0 0
    %407 = vmatpush1.bf16.msra.mxu0 0
    %408 = vmatprep.subr.bf16.mxu0 0
    %409 = vmatpush1.bf16.msra.mxu0 0
    %410 = vmatprep.subr.bf16.mxu0 0
    %411 = vmatpush1.bf16.msra.mxu0 0
    %412 = vmatprep.subr.bf16.mxu0 0
    %413 = vmatpush1.bf16.msra.mxu0 0
    %414 = vmatprep.subr.bf16.mxu0 0
    %415 = vmatpush1.bf16.msra.mxu0 0
    %416 = vmatprep.subr.bf16.mxu0 0
    %417 = vmatpush1.bf16.msra.mxu0 0
    %418 = vmatprep.mubr.bf16.mxu0 0
    %419 = vmatmul.mubr.bf16.gmra.mrb[0].mxu0 %v283
    %v420 = vpop.f32.mrb[0].mxu0
    %v421 = vadd.f32 %v336, %v420
    %v422 = vpop.f32.mrb[0].mxu0
    %v423 = vpop.f32.mrb[0].mxu0
    %v424 = vadd.f32 %v336, %v423
    %v425 = vpop.f32.mrb[0].mxu0
    %426 = vmatprep.mubr.bf16.mxu0 0
    %427 = vmatmul.mubr.bf16.gmra.mrb[0].mxu0 %v284
    %v428 = vpop.f32.mrb[0].mxu0
    %v429 = vadd.f32 %v336, %v428
    %v430 = vpop.f32.mrb[0].mxu0
    %v431 = vpop.f32.mrb[0].mxu0
    %v432 = vadd.f32 %v336, %v431
    %v433 = vpop.f32.mrb[0].mxu0
    %434 = vmatprep.mubr.bf16.mxu0 0
    %435 = vmatmul.mubr.bf16.gmra.mrb[0].mxu0 %v285
    %v436 = vpop.f32.mrb[0].mxu0
    %v437 = vadd.f32 %v336, %v436
    %v438 = vpop.f32.mrb[0].mxu0
    %v439 = vpop.f32.mrb[0].mxu0
    %v440 = vadd.f32 %v336, %v439
    %v441 = vpop.f32.mrb[0].mxu0
    %442 = vmatprep.mubr.bf16.mxu0 0
    %443 = vmatmul.mubr.bf16.gmra.mrb[0].mxu0 %v286
    %v444 = vpop.f32.mrb[0].mxu0
    %v445 = vadd.f32 %v336, %v444
    %v446 = vpop.f32.mrb[0].mxu0
    %v447 = vpop.f32.mrb[0].mxu0
    %v448 = vadd.f32 %v336, %v447
    %v449 = vpop.f32.mrb[0].mxu0
    %450 = vmatprep.mubr.bf16.mxu0 0
    %451 = vmatmul.mubr.bf16.gmra.mrb[0].mxu0 %v287
    %v452 = vpop.f32.mrb[0].mxu0
    %v453 = vadd.f32 %v336, %v452
    %v454 = vpop.f32.mrb[0].mxu0
    %v455 = vpop.f32.mrb[0].mxu0
    %v456 = vadd.f32 %v336, %v455
    %v457 = vpop.f32.mrb[0].mxu0
    %458 = vmatprep.mubr.bf16.mxu0 0
    %459 = vmatmul.mubr.bf16.gmra.mrb[0].mxu0 %v288
    %v460 = vpop.f32.mrb[0].mxu0
    %v461 = vadd.f32 %v336, %v460
    %v462 = vpop.f32.mrb[0].mxu0
    %v463 = vpop.f32.mrb[0].mxu0
    %v464 = vadd.f32 %v336, %v463
    %v465 = vpop.f32.mrb[0].mxu0
    %466 = vmatprep.mubr.bf16.mxu0 0
    %467 = vmatmul.mubr.bf16.gmra.mrb[0].mxu0 %v289
    %v468 = vpop.f32.mrb[0].mxu0
    %v469 = vadd.f32 %v336, %v468
    %v470 = vpop.f32.mrb[0].mxu0
    %v471 = vpop.f32.mrb[0].mxu0
    %v472 = vadd.f32 %v336, %v471
    %v473 = vpop.f32.mrb[0].mxu0
    %474 = vmatprep.mubr.bf16.mxu0 0
    %475 = vmatmul.mubr.bf16.gmra.mrb[0].mxu0 %v290
    %v476 = vpop.f32.mrb[0].mxu0
    %v477 = vadd.f32 %v336, %v476
    %v478 = vpop.f32.mrb[0].mxu0
    %v479 = vpop.f32.mrb[0].mxu0
    %v480 = vadd.f32 %v336, %v479
    %v481 = vpop.f32.mrb[0].mxu0
    %482 = vdwg.mxu0
    %v483 = vmax.f32 %v421, 0.0
    %v484 = vmax.f32 %v424, 0.0
    %v485 = vmax.f32 %v429, 0.0
    %v486 = vmax.f32 %v432, 0.0
    %v487 = vmax.f32 %v437, 0.0
    %v488 = vmax.f32 %v440, 0.0
    %v489 = vmax.f32 %v445, 0.0
    %v490 = vmax.f32 %v448, 0.0
    %v491 = vmax.f32 %v453, 0.0
    %v492 = vmax.f32 %v456, 0.0
    %v493 = vmax.f32 %v461, 0.0
    %v494 = vmax.f32 %v464, 0.0
    %v495 = vmax.f32 %v469, 0.0
    %v496 = vmax.f32 %v472, 0.0
    %v497 = vmax.f32 %v477, 0.0
    %v498 = vmax.f32 %v480, 0.0
    %v499 = vpack.c.bf16 %v484, %v483
    %v500 = vpack.c.bf16 %v486, %v485
    %v501 = vpack.c.bf16 %v488, %v487
    %v502 = vpack.c.bf16 %v490, %v489
    %v503 = vpack.c.bf16 %v492, %v491
    %v504 = vpack.c.bf16 %v494, %v493
    %v505 = vpack.c.bf16 %v496, %v495
    %v506 = vpack.c.bf16 %v498, %v497
    %v507 = vld [vmem:[%s6] sm:$0xf]
    %v508 = vld [vmem:[%s6 + $0x4] sm:$0xf]
    %v509 = vld [vmem:[%s6 + $0x8] sm:$0xf]
    %v510 = vld [vmem:[%s6 + $0xc] sm:$0xf]
    %v511 = vld [vmem:[%s6 + $0x10] sm:$0xf]
    %v512 = vld [vmem:[%s6 + $0x14] sm:$0xf]
    %v513 = vld [vmem:[%s6 + $0x18] sm:$0xf]
    %v514 = vld [vmem:[%s6 + $0x1c] sm:$0xf]
    %v515 = vld [vmem:[%s6 + $0x20] sm:$0xf]
    %v516 = vld [vmem:[%s6 + $0x24] sm:$0xf]
    %v517 = vld [vmem:[%s6 + $0x28] sm:$0xf]
    %v518 = vld [vmem:[%s6 + $0x2c] sm:$0xf]
    %v519 = vld [vmem:[%s6 + $0x30] sm:$0xf]
    %v520 = vld [vmem:[%s6 + $0x34] sm:$0xf]
    %v521 = vld [vmem:[%s6 + $0x38] sm:$0xf]
    %v522 = vld [vmem:[%s6 + $0x3c] sm:$0xf]
    %v523 = vld [vmem:[%s7] sm:$0x1]
    %v525 = vlaneseq
    %v526 = vshrl.u32 %v525, 7
    %v527 = vsub.s32 0, %v526
    %v528 = vrot.slane %v523, %v527
    %v546 = vunpack.c.l.b16 %v507
    %v547 = vunpack.c.l.b16 %v508
    %v548 = vunpack.c.l.b16 %v509
    %v549 = vunpack.c.l.b16 %v510
    %v550 = vunpack.c.l.b16 %v511
    %v551 = vunpack.c.l.b16 %v512
    %v552 = vunpack.c.l.b16 %v513
    %v553 = vunpack.c.l.b16 %v514
    %v554 = vunpack.c.l.b16 %v515
    %v555 = vunpack.c.l.b16 %v516
    %v556 = vunpack.c.l.b16 %v517
    %v557 = vunpack.c.l.b16 %v518
    %v558 = vunpack.c.l.b16 %v519
    %v559 = vunpack.c.l.b16 %v520
    %v560 = vunpack.c.l.b16 %v521
    %v561 = vunpack.c.l.b16 %v522
    %v562 = vpack.c.b16 %v547, %v546
    %v563 = vpack.c.b16 %v549, %v548
    %v564 = vpack.c.b16 %v551, %v550
    %v565 = vpack.c.b16 %v553, %v552
    %v566 = vpack.c.b16 %v555, %v554
    %v567 = vpack.c.b16 %v557, %v556
    %v568 = vpack.c.b16 %v559, %v558
    %v569 = vpack.c.b16 %v561, %v560
    %578 = vmatprep.subr.bf16.mxu0 0
    %579 = vmatpush1.bf16.msra.mxu0 %v562
    %580 = vmatprep.subr.bf16.mxu0 0
    %581 = vmatpush1.bf16.msra.mxu0 %v563
    %582 = vmatprep.subr.bf16.mxu0 0
    %583 = vmatpush1.bf16.msra.mxu0 %v564
    %584 = vmatprep.subr.bf16.mxu0 0
    %585 = vmatpush1.bf16.msra.mxu0 %v565
    %586 = vmatprep.subr.bf16.mxu0 0
    %587 = vmatpush1.bf16.msra.mxu0 %v566
    %588 = vmatprep.subr.bf16.mxu0 0
    %589 = vmatpush1.bf16.msra.mxu0 %v567
    %590 = vmatprep.subr.bf16.mxu0 0
    %591 = vmatpush1.bf16.msra.mxu0 %v568
    %592 = vmatprep.subr.bf16.mxu0 0
    %593 = vmatpush1.bf16.msra.mxu0 %v569
    %594 = vmatprep.subr.bf16.mxu0 0
    %595 = vmatpush1.bf16.msra.mxu0 0
    %596 = vmatprep.subr.bf16.mxu0 0
    %597 = vmatpush1.bf16.msra.mxu0 0
    %598 = vmatprep.subr.bf16.mxu0 0
    %599 = vmatpush1.bf16.msra.mxu0 0
    %600 = vmatprep.subr.bf16.mxu0 0
    %601 = vmatpush1.bf16.msra.mxu0 0
    %602 = vmatprep.subr.bf16.mxu0 0
    %603 = vmatpush1.bf16.msra.mxu0 0
    %604 = vmatprep.subr.bf16.mxu0 0
    %605 = vmatpush1.bf16.msra.mxu0 0
    %606 = vmatprep.subr.bf16.mxu0 0
    %607 = vmatpush1.bf16.msra.mxu0 0
    %608 = vmatprep.subr.bf16.mxu0 0
    %609 = vmatpush1.bf16.msra.mxu0 0
    %610 = vmatprep.mubr.bf16.mxu0 0
    %611 = vmatmul.mubr.bf16.gmra.mrb[0].mxu0 %v499
    %v612 = vpop.f32.mrb[0].mxu0
    %v613 = vadd.f32 %v528, %v612
    %v614 = vpop.f32.mrb[0].mxu0
    %v615 = vpop.f32.mrb[0].mxu0
    %v616 = vadd.f32 %v528, %v615
    %v617 = vpop.f32.mrb[0].mxu0
    %618 = vmatprep.mubr.bf16.mxu0 0
    %619 = vmatmul.mubr.bf16.gmra.mrb[0].mxu0 %v500
    %v620 = vpop.f32.mrb[0].mxu0
    %v621 = vadd.f32 %v528, %v620
    %v622 = vpop.f32.mrb[0].mxu0
    %v623 = vpop.f32.mrb[0].mxu0
    %v624 = vadd.f32 %v528, %v623
    %v625 = vpop.f32.mrb[0].mxu0
    %626 = vmatprep.mubr.bf16.mxu0 0
    %627 = vmatmul.mubr.bf16.gmra.mrb[0].mxu0 %v501
    %v628 = vpop.f32.mrb[0].mxu0
    %v629 = vadd.f32 %v528, %v628
    %v630 = vpop.f32.mrb[0].mxu0
    %v631 = vpop.f32.mrb[0].mxu0
    %v632 = vadd.f32 %v528, %v631
    %v633 = vpop.f32.mrb[0].mxu0
    %634 = vmatprep.mubr.bf16.mxu0 0
    %635 = vmatmul.mubr.bf16.gmra.mrb[0].mxu0 %v502
    %v636 = vpop.f32.mrb[0].mxu0
    %v637 = vadd.f32 %v528, %v636
    %v638 = vpop.f32.mrb[0].mxu0
    %v639 = vpop.f32.mrb[0].mxu0
    %v640 = vadd.f32 %v528, %v639
    %v641 = vpop.f32.mrb[0].mxu0
    %642 = vmatprep.mubr.bf16.mxu0 0
    %643 = vmatmul.mubr.bf16.gmra.mrb[0].mxu0 %v503
    %v644 = vpop.f32.mrb[0].mxu0
    %v645 = vadd.f32 %v528, %v644
    %v646 = vpop.f32.mrb[0].mxu0
    %v647 = vpop.f32.mrb[0].mxu0
    %v648 = vadd.f32 %v528, %v647
    %v649 = vpop.f32.mrb[0].mxu0
    %650 = vmatprep.mubr.bf16.mxu0 0
    %651 = vmatmul.mubr.bf16.gmra.mrb[0].mxu0 %v504
    %v652 = vpop.f32.mrb[0].mxu0
    %v653 = vadd.f32 %v528, %v652
    %v654 = vpop.f32.mrb[0].mxu0
    %v655 = vpop.f32.mrb[0].mxu0
    %v656 = vadd.f32 %v528, %v655
    %v657 = vpop.f32.mrb[0].mxu0
    %658 = vmatprep.mubr.bf16.mxu0 0
    %659 = vmatmul.mubr.bf16.gmra.mrb[0].mxu0 %v505
    %v660 = vpop.f32.mrb[0].mxu0
    %v661 = vadd.f32 %v528, %v660
    %v662 = vpop.f32.mrb[0].mxu0
    %v663 = vpop.f32.mrb[0].mxu0
    %v664 = vadd.f32 %v528, %v663
    %v665 = vpop.f32.mrb[0].mxu0
    %666 = vmatprep.mubr.bf16.mxu0 0
    %667 = vmatmul.mubr.bf16.gmra.mrb[0].mxu0 %v506
    %v668 = vpop.f32.mrb[0].mxu0
    %v669 = vadd.f32 %v528, %v668
    %v670 = vpop.f32.mrb[0].mxu0
    %v671 = vpop.f32.mrb[0].mxu0
    %v672 = vadd.f32 %v528, %v671
    %v673 = vpop.f32.mrb[0].mxu0
    %674 = vdwg.mxu0
    %v675 = vpack.c.bf16 %v616, %v613
    %v676 = vpack.c.bf16 %v624, %v621
    %v677 = vpack.c.bf16 %v632, %v629
    %v678 = vpack.c.bf16 %v640, %v637
    %v679 = vpack.c.bf16 %v648, %v645
    %v680 = vpack.c.bf16 %v656, %v653
    %v681 = vpack.c.bf16 %v664, %v661
    %v682 = vpack.c.bf16 %v672, %v669
    %v683 = vld [vmem:[%s8] sm:$0xf]
    %v684 = vld [vmem:[%s8 + $0x4] sm:$0xf]
    %v685 = vld [vmem:[%s8 + $0x8] sm:$0xf]
    %v686 = vld [vmem:[%s8 + $0xc] sm:$0xf]
    %v687 = vld [vmem:[%s8 + $0x10] sm:$0xf]
    %v688 = vld [vmem:[%s8 + $0x14] sm:$0xf]
    %v689 = vld [vmem:[%s8 + $0x18] sm:$0xf]
    %v690 = vld [vmem:[%s8 + $0x1c] sm:$0xf]
    %v691 = vld [vmem:[%s8 + $0x20] sm:$0xf]
    %v692 = vld [vmem:[%s8 + $0x24] sm:$0xf]
    %v693 = vld [vmem:[%s8 + $0x28] sm:$0xf]
    %v694 = vld [vmem:[%s8 + $0x2c] sm:$0xf]
    %v695 = vld [vmem:[%s8 + $0x30] sm:$0xf]
    %v696 = vld [vmem:[%s8 + $0x34] sm:$0xf]
    %v697 = vld [vmem:[%s8 + $0x38] sm:$0xf]
    %v698 = vld [vmem:[%s8 + $0x3c] sm:$0xf]
    %v699 = vld [vmem:[%s9] sm:$0x1]
    %v701 = vlaneseq
    %v702 = vshrl.u32 %v701, 7
    %v703 = vsub.s32 0, %v702
    %v704 = vrot.slane %v699, %v703
    %v722 = vunpack.c.l.b16 %v683
    %v723 = vunpack.c.l.b16 %v684
    %v724 = vunpack.c.l.b16 %v685
    %v725 = vunpack.c.l.b16 %v686
    %v726 = vunpack.c.l.b16 %v687
    %v727 = vunpack.c.l.b16 %v688
    %v728 = vunpack.c.l.b16 %v689
    %v729 = vunpack.c.l.b16 %v690
    %v730 = vunpack.c.l.b16 %v691
    %v731 = vunpack.c.l.b16 %v692
    %v732 = vunpack.c.l.b16 %v693
    %v733 = vunpack.c.l.b16 %v694
    %v734 = vunpack.c.l.b16 %v695
    %v735 = vunpack.c.l.b16 %v696
    %v736 = vunpack.c.l.b16 %v697
    %v737 = vunpack.c.l.b16 %v698
    %v738 = vpack.c.b16 %v723, %v722
    %v739 = vpack.c.b16 %v725, %v724
    %v740 = vpack.c.b16 %v727, %v726
    %v741 = vpack.c.b16 %v729, %v728
    %v742 = vpack.c.b16 %v731, %v730
    %v743 = vpack.c.b16 %v733, %v732
    %v744 = vpack.c.b16 %v735, %v734
    %v745 = vpack.c.b16 %v737, %v736
    %754 = vmatprep.subr.bf16.mxu0 0
    %755 = vmatpush1.bf16.msra.mxu0 %v738
    %756 = vmatprep.subr.bf16.mxu0 0
    %757 = vmatpush1.bf16.msra.mxu0 %v739
    %758 = vmatprep.subr.bf16.mxu0 0
    %759 = vmatpush1.bf16.msra.mxu0 %v740
    %760 = vmatprep.subr.bf16.mxu0 0
    %761 = vmatpush1.bf16.msra.mxu0 %v741
    %762 = vmatprep.subr.bf16.mxu0 0
    %763 = vmatpush1.bf16.msra.mxu0 %v742
    %764 = vmatprep.subr.bf16.mxu0 0
    %765 = vmatpush1.bf16.msra.mxu0 %v743
    %766 = vmatprep.subr.bf16.mxu0 0
    %767 = vmatpush1.bf16.msra.mxu0 %v744
    %768 = vmatprep.subr.bf16.mxu0 0
    %769 = vmatpush1.bf16.msra.mxu0 %v745
    %770 = vmatprep.subr.bf16.mxu0 0
    %771 = vmatpush1.bf16.msra.mxu0 0
    %772 = vmatprep.subr.bf16.mxu0 0
    %773 = vmatpush1.bf16.msra.mxu0 0
    %774 = vmatprep.subr.bf16.mxu0 0
    %775 = vmatpush1.bf16.msra.mxu0 0
    %776 = vmatprep.subr.bf16.mxu0 0
    %777 = vmatpush1.bf16.msra.mxu0 0
    %778 = vmatprep.subr.bf16.mxu0 0
    %779 = vmatpush1.bf16.msra.mxu0 0
    %780 = vmatprep.subr.bf16.mxu0 0
    %781 = vmatpush1.bf16.msra.mxu0 0
    %782 = vmatprep.subr.bf16.mxu0 0
    %783 = vmatpush1.bf16.msra.mxu0 0
    %784 = vmatprep.subr.bf16.mxu0 0
    %785 = vmatpush1.bf16.msra.mxu0 0
    %786 = vmatprep.mubr.bf16.mxu0 0
    %787 = vmatmul.mubr.bf16.gmra.mrb[0].mxu0 %v307
    %v788 = vpop.f32.mrb[0].mxu0
    %v789 = vadd.f32 %v704, %v788
    %v790 = vpop.f32.mrb[0].mxu0
    %v791 = vpop.f32.mrb[0].mxu0
    %v792 = vadd.f32 %v704, %v791
    %v793 = vpop.f32.mrb[0].mxu0
    %794 = vmatprep.mubr.bf16.mxu0 0
    %795 = vmatmul.mubr.bf16.gmra.mrb[0].mxu0 %v308
    %v796 = vpop.f32.mrb[0].mxu0
    %v797 = vadd.f32 %v704, %v796
    %v798 = vpop.f32.mrb[0].mxu0
    %v799 = vpop.f32.mrb[0].mxu0
    %v800 = vadd.f32 %v704, %v799
    %v801 = vpop.f32.mrb[0].mxu0
    %802 = vmatprep.mubr.bf16.mxu0 0
    %803 = vmatmul.mubr.bf16.gmra.mrb[0].mxu0 %v309
    %v804 = vpop.f32.mrb[0].mxu0
    %v805 = vadd.f32 %v704, %v804
    %v806 = vpop.f32.mrb[0].mxu0
    %v807 = vpop.f32.mrb[0].mxu0
    %v808 = vadd.f32 %v704, %v807
    %v809 = vpop.f32.mrb[0].mxu0
    %810 = vmatprep.mubr.bf16.mxu0 0
    %811 = vmatmul.mubr.bf16.gmra.mrb[0].mxu0 %v310
    %v812 = vpop.f32.mrb[0].mxu0
    %v813 = vadd.f32 %v704, %v812
    %v814 = vpop.f32.mrb[0].mxu0
    %v815 = vpop.f32.mrb[0].mxu0
    %v816 = vadd.f32 %v704, %v815
    %v817 = vpop.f32.mrb[0].mxu0
    %818 = vmatprep.mubr.bf16.mxu0 0
    %819 = vmatmul.mubr.bf16.gmra.mrb[0].mxu0 %v311
    %v820 = vpop.f32.mrb[0].mxu0
    %v821 = vadd.f32 %v704, %v820
    %v822 = vpop.f32.mrb[0].mxu0
    %v823 = vpop.f32.mrb[0].mxu0
    %v824 = vadd.f32 %v704, %v823
    %v825 = vpop.f32.mrb[0].mxu0
    %826 = vmatprep.mubr.bf16.mxu0 0
    %827 = vmatmul.mubr.bf16.gmra.mrb[0].mxu0 %v312
    %v828 = vpop.f32.mrb[0].mxu0
    %v829 = vadd.f32 %v704, %v828
    %v830 = vpop.f32.mrb[0].mxu0
    %v831 = vpop.f32.mrb[0].mxu0
    %v832 = vadd.f32 %v704, %v831
    %v833 = vpop.f32.mrb[0].mxu0
    %834 = vmatprep.mubr.bf16.mxu0 0
    %835 = vmatmul.mubr.bf16.gmra.mrb[0].mxu0 %v313
    %v836 = vpop.f32.mrb[0].mxu0
    %v837 = vadd.f32 %v704, %v836
    %v838 = vpop.f32.mrb[0].mxu0
    %v839 = vpop.f32.mrb[0].mxu0
    %v840 = vadd.f32 %v704, %v839
    %v841 = vpop.f32.mrb[0].mxu0
    %842 = vmatprep.mubr.bf16.mxu0 0
    %843 = vmatmul.mubr.bf16.gmra.mrb[0].mxu0 %v314
    %v844 = vpop.f32.mrb[0].mxu0
    %v845 = vadd.f32 %v704, %v844
    %v846 = vpop.f32.mrb[0].mxu0
    %v847 = vpop.f32.mrb[0].mxu0
    %v848 = vadd.f32 %v704, %v847
    %v849 = vpop.f32.mrb[0].mxu0
    %850 = vdwg.mxu0
    %v851 = vpack.c.bf16 %v792, %v789
    %v852 = vpack.c.bf16 %v800, %v797
    %v853 = vpack.c.bf16 %v808, %v805
    %v854 = vpack.c.bf16 %v816, %v813
    %v855 = vpack.c.bf16 %v824, %v821
    %v856 = vpack.c.bf16 %v832, %v829
    %v857 = vpack.c.bf16 %v840, %v837
    %v858 = vpack.c.bf16 %v848, %v845
    %v859 = vld [vmem:[%s10] sm:$0x1]
    %v860 = vld [vmem:[%s11] sm:$0x1]
    %v862 = vlaneseq
    %v863 = vshrl.u32 %v862, 7
    %v864 = vsub.s32 0, %v863
    %v865 = vrot.slane %v860, %v864
    %vm867 = vcmask 15360
    %v869 = vsel %vm867, %v89, 0
    %v872 = vsel %vm867, %v90, 0
    %v875 = vsel %vm867, %v91, 0
    %v878 = vsel %vm867, %v92, 0
    %v881 = vsel %vm867, %v93, 0
    %v884 = vsel %vm867, %v94, 0
    %v887 = vsel %vm867, %v95, 0
    %v890 = vsel %vm867, %v96, 0
    %v893 = vsel %vm144, %v859, 0
    %895 = vmatprep.subr.bf16.mxu0 0
    %896 = vmatpush1.bf16.msra.mxu0 %v893
    %897 = vmatprep.subr.bf16.mxu0 0
    %898 = vmatpush1.bf16.msra.mxu0 0
    %899 = vmatprep.subr.bf16.mxu0 0
    %900 = vmatpush1.bf16.msra.mxu0 0
    %901 = vmatprep.subr.bf16.mxu0 0
    %902 = vmatpush1.bf16.msra.mxu0 0
    %903 = vmatprep.subr.bf16.mxu0 0
    %904 = vmatpush1.bf16.msra.mxu0 0
    %905 = vmatprep.subr.bf16.mxu0 0
    %906 = vmatpush1.bf16.msra.mxu0 0
    %907 = vmatprep.subr.bf16.mxu0 0
    %908 = vmatpush1.bf16.msra.mxu0 0
    %909 = vmatprep.subr.bf16.mxu0 0
    %910 = vmatpush1.bf16.msra.mxu0 0
    %911 = vmatprep.subr.bf16.mxu0 0
    %912 = vmatpush1.bf16.msra.mxu0 0
    %913 = vmatprep.subr.bf16.mxu0 0
    %914 = vmatpush1.bf16.msra.mxu0 0
    %915 = vmatprep.subr.bf16.mxu0 0
    %916 = vmatpush1.bf16.msra.mxu0 0
    %917 = vmatprep.subr.bf16.mxu0 0
    %918 = vmatpush1.bf16.msra.mxu0 0
    %919 = vmatprep.subr.bf16.mxu0 0
    %920 = vmatpush1.bf16.msra.mxu0 0
    %921 = vmatprep.subr.bf16.mxu0 0
    %922 = vmatpush1.bf16.msra.mxu0 0
    %923 = vmatprep.subr.bf16.mxu0 0
    %924 = vmatpush1.bf16.msra.mxu0 0
    %925 = vmatprep.subr.bf16.mxu0 0
    %926 = vmatpush1.bf16.msra.mxu0 0
    %927 = vmatprep.mubr.bf16.mxu0 0
    %928 = vmatmul.mubr.bf16.gmra.mrb[0].mxu0 %v869
    %v929 = vpop.f32.mrb[0].mxu0
    %v930 = vadd.f32 %v865, %v929
    %v931 = vpop.f32.mrb[0].mxu0
    %v932 = vpop.f32.mrb[0].mxu0
    %v933 = vadd.f32 %v865, %v932
    %v934 = vpop.f32.mrb[0].mxu0
    %935 = vmatprep.mubr.bf16.mxu0 0
    %936 = vmatmul.mubr.bf16.gmra.mrb[0].mxu0 %v872
    %v937 = vpop.f32.mrb[0].mxu0
    %v938 = vadd.f32 %v865, %v937
    %v939 = vpop.f32.mrb[0].mxu0
    %v940 = vpop.f32.mrb[0].mxu0
    %v941 = vadd.f32 %v865, %v940
    %v942 = vpop.f32.mrb[0].mxu0
    %943 = vmatprep.mubr.bf16.mxu0 0
    %944 = vmatmul.mubr.bf16.gmra.mrb[0].mxu0 %v875
    %v945 = vpop.f32.mrb[0].mxu0
    %v946 = vadd.f32 %v865, %v945
    %v947 = vpop.f32.mrb[0].mxu0
    %v948 = vpop.f32.mrb[0].mxu0
    %v949 = vadd.f32 %v865, %v948
    %v950 = vpop.f32.mrb[0].mxu0
    %951 = vmatprep.mubr.bf16.mxu0 0
    %952 = vmatmul.mubr.bf16.gmra.mrb[0].mxu0 %v878
    %v953 = vpop.f32.mrb[0].mxu0
    %v954 = vadd.f32 %v865, %v953
    %v955 = vpop.f32.mrb[0].mxu0
    %v956 = vpop.f32.mrb[0].mxu0
    %v957 = vadd.f32 %v865, %v956
    %v958 = vpop.f32.mrb[0].mxu0
    %959 = vmatprep.mubr.bf16.mxu0 0
    %960 = vmatmul.mubr.bf16.gmra.mrb[0].mxu0 %v881
    %v961 = vpop.f32.mrb[0].mxu0
    %v962 = vadd.f32 %v865, %v961
    %v963 = vpop.f32.mrb[0].mxu0
    %v964 = vpop.f32.mrb[0].mxu0
    %v965 = vadd.f32 %v865, %v964
    %v966 = vpop.f32.mrb[0].mxu0
    %967 = vmatprep.mubr.bf16.mxu0 0
    %968 = vmatmul.mubr.bf16.gmra.mrb[0].mxu0 %v884
    %v969 = vpop.f32.mrb[0].mxu0
    %v970 = vadd.f32 %v865, %v969
    %v971 = vpop.f32.mrb[0].mxu0
    %v972 = vpop.f32.mrb[0].mxu0
    %v973 = vadd.f32 %v865, %v972
    %v974 = vpop.f32.mrb[0].mxu0
    %975 = vmatprep.mubr.bf16.mxu0 0
    %976 = vmatmul.mubr.bf16.gmra.mrb[0].mxu0 %v887
    %v977 = vpop.f32.mrb[0].mxu0
    %v978 = vadd.f32 %v865, %v977
    %v979 = vpop.f32.mrb[0].mxu0
    %v980 = vpop.f32.mrb[0].mxu0
    %v981 = vadd.f32 %v865, %v980
    %v982 = vpop.f32.mrb[0].mxu0
    %983 = vmatprep.mubr.bf16.mxu0 0
    %984 = vmatmul.mubr.bf16.gmra.mrb[0].mxu0 %v890
    %v985 = vpop.f32.mrb[0].mxu0
    %v986 = vadd.f32 %v865, %v985
    %v987 = vpop.f32.mrb[0].mxu0
    %v988 = vpop.f32.mrb[0].mxu0
    %v989 = vadd.f32 %v865, %v988
    %v990 = vpop.f32.mrb[0].mxu0
    %991 = vdwg.mxu0
    %v992 = vmax.f32 %v930, 0.0
    %v993 = vmax.f32 %v933, 0.0
    %v994 = vmax.f32 %v938, 0.0
    %v995 = vmax.f32 %v941, 0.0
    %v996 = vmax.f32 %v946, 0.0
    %v997 = vmax.f32 %v949, 0.0
    %v998 = vmax.f32 %v954, 0.0
    %v999 = vmax.f32 %v957, 0.0
    %v1000 = vmax.f32 %v962, 0.0
    %v1001 = vmax.f32 %v965, 0.0
    %v1002 = vmax.f32 %v970, 0.0
    %v1003 = vmax.f32 %v973, 0.0
    %v1004 = vmax.f32 %v978, 0.0
    %v1005 = vmax.f32 %v981, 0.0
    %v1006 = vmax.f32 %v986, 0.0
    %v1007 = vmax.f32 %v989, 0.0
    %v1008 = vpack.c.bf16 %v993, %v992
    %v1009 = vpack.c.bf16 %v995, %v994
    %v1010 = vpack.c.bf16 %v997, %v996
    %v1011 = vpack.c.bf16 %v999, %v998
    %v1012 = vpack.c.bf16 %v1001, %v1000
    %v1013 = vpack.c.bf16 %v1003, %v1002
    %v1014 = vpack.c.bf16 %v1005, %v1004
    %v1015 = vpack.c.bf16 %v1007, %v1006
    %v1016 = vld [vmem:[%s12] sm:$0xf]
    %v1017 = vld [vmem:[%s12 + $0x4] sm:$0xf]
    %v1018 = vld [vmem:[%s12 + $0x8] sm:$0xf]
    %v1019 = vld [vmem:[%s12 + $0xc] sm:$0xf]
    %v1020 = vld [vmem:[%s12 + $0x10] sm:$0xf]
    %v1021 = vld [vmem:[%s12 + $0x14] sm:$0xf]
    %v1022 = vld [vmem:[%s12 + $0x18] sm:$0xf]
    %v1023 = vld [vmem:[%s12 + $0x1c] sm:$0xf]
    %v1024 = vld [vmem:[%s12 + $0x20] sm:$0xf]
    %v1025 = vld [vmem:[%s12 + $0x24] sm:$0xf]
    %v1026 = vld [vmem:[%s12 + $0x28] sm:$0xf]
    %v1027 = vld [vmem:[%s12 + $0x2c] sm:$0xf]
    %v1028 = vld [vmem:[%s12 + $0x30] sm:$0xf]
    %v1029 = vld [vmem:[%s12 + $0x34] sm:$0xf]
    %v1030 = vld [vmem:[%s12 + $0x38] sm:$0xf]
    %v1031 = vld [vmem:[%s12 + $0x3c] sm:$0xf]
    %v1032 = vld [vmem:[%s13] sm:$0x1]
    %v1034 = vlaneseq
    %v1035 = vshrl.u32 %v1034, 7
    %v1036 = vsub.s32 0, %v1035
    %v1037 = vrot.slane %v1032, %v1036
    %v1055 = vunpack.c.l.b16 %v1016
    %v1056 = vunpack.c.l.b16 %v1017
    %v1057 = vunpack.c.l.b16 %v1018
    %v1058 = vunpack.c.l.b16 %v1019
    %v1059 = vunpack.c.l.b16 %v1020
    %v1060 = vunpack.c.l.b16 %v1021
    %v1061 = vunpack.c.l.b16 %v1022
    %v1062 = vunpack.c.l.b16 %v1023
    %v1063 = vunpack.c.l.b16 %v1024
    %v1064 = vunpack.c.l.b16 %v1025
    %v1065 = vunpack.c.l.b16 %v1026
    %v1066 = vunpack.c.l.b16 %v1027
    %v1067 = vunpack.c.l.b16 %v1028
    %v1068 = vunpack.c.l.b16 %v1029
    %v1069 = vunpack.c.l.b16 %v1030
    %v1070 = vunpack.c.l.b16 %v1031
    %v1071 = vpack.c.b16 %v1056, %v1055
    %v1072 = vpack.c.b16 %v1058, %v1057
    %v1073 = vpack.c.b16 %v1060, %v1059
    %v1074 = vpack.c.b16 %v1062, %v1061
    %v1075 = vpack.c.b16 %v1064, %v1063
    %v1076 = vpack.c.b16 %v1066, %v1065
    %v1077 = vpack.c.b16 %v1068, %v1067
    %v1078 = vpack.c.b16 %v1070, %v1069
    %1087 = vmatprep.subr.bf16.mxu0 0
    %1088 = vmatpush1.bf16.msra.mxu0 %v1071
    %1089 = vmatprep.subr.bf16.mxu0 0
    %1090 = vmatpush1.bf16.msra.mxu0 %v1072
    %1091 = vmatprep.subr.bf16.mxu0 0
    %1092 = vmatpush1.bf16.msra.mxu0 %v1073
    %1093 = vmatprep.subr.bf16.mxu0 0
    %1094 = vmatpush1.bf16.msra.mxu0 %v1074
    %1095 = vmatprep.subr.bf16.mxu0 0
    %1096 = vmatpush1.bf16.msra.mxu0 %v1075
    %1097 = vmatprep.subr.bf16.mxu0 0
    %1098 = vmatpush1.bf16.msra.mxu0 %v1076
    %1099 = vmatprep.subr.bf16.mxu0 0
    %1100 = vmatpush1.bf16.msra.mxu0 %v1077
    %1101 = vmatprep.subr.bf16.mxu0 0
    %1102 = vmatpush1.bf16.msra.mxu0 %v1078
    %1103 = vmatprep.subr.bf16.mxu0 0
    %1104 = vmatpush1.bf16.msra.mxu0 0
    %1105 = vmatprep.subr.bf16.mxu0 0
    %1106 = vmatpush1.bf16.msra.mxu0 0
    %1107 = vmatprep.subr.bf16.mxu0 0
    %1108 = vmatpush1.bf16.msra.mxu0 0
    %1109 = vmatprep.subr.bf16.mxu0 0
    %1110 = vmatpush1.bf16.msra.mxu0 0
    %1111 = vmatprep.subr.bf16.mxu0 0
    %1112 = vmatpush1.bf16.msra.mxu0 0
    %1113 = vmatprep.subr.bf16.mxu0 0
    %1114 = vmatpush1.bf16.msra.mxu0 0
    %1115 = vmatprep.subr.bf16.mxu0 0
    %1116 = vmatpush1.bf16.msra.mxu0 0
    %1117 = vmatprep.subr.bf16.mxu0 0
    %1118 = vmatpush1.bf16.msra.mxu0 0
    %1119 = vmatprep.mubr.bf16.mxu0 0
    %1120 = vmatmul.mubr.bf16.gmra.mrb[0].mxu0 %v1008
    %v1121 = vpop.f32.mrb[0].mxu0
    %v1122 = vadd.f32 %v1037, %v1121
    %v1123 = vpop.f32.mrb[0].mxu0
    %v1124 = vpop.f32.mrb[0].mxu0
    %v1125 = vadd.f32 %v1037, %v1124
    %v1126 = vpop.f32.mrb[0].mxu0
    %1127 = vmatprep.mubr.bf16.mxu0 0
    %1128 = vmatmul.mubr.bf16.gmra.mrb[0].mxu0 %v1009
    %v1129 = vpop.f32.mrb[0].mxu0
    %v1130 = vadd.f32 %v1037, %v1129
    %v1131 = vpop.f32.mrb[0].mxu0
    %v1132 = vpop.f32.mrb[0].mxu0
    %v1133 = vadd.f32 %v1037, %v1132
    %v1134 = vpop.f32.mrb[0].mxu0
    %1135 = vmatprep.mubr.bf16.mxu0 0
    %1136 = vmatmul.mubr.bf16.gmra.mrb[0].mxu0 %v1010
    %v1137 = vpop.f32.mrb[0].mxu0
    %v1138 = vadd.f32 %v1037, %v1137
    %v1139 = vpop.f32.mrb[0].mxu0
    %v1140 = vpop.f32.mrb[0].mxu0
    %v1141 = vadd.f32 %v1037, %v1140
    %v1142 = vpop.f32.mrb[0].mxu0
    %1143 = vmatprep.mubr.bf16.mxu0 0
    %1144 = vmatmul.mubr.bf16.gmra.mrb[0].mxu0 %v1011
    %v1145 = vpop.f32.mrb[0].mxu0
    %v1146 = vadd.f32 %v1037, %v1145
    %v1147 = vpop.f32.mrb[0].mxu0
    %v1148 = vpop.f32.mrb[0].mxu0
    %v1149 = vadd.f32 %v1037, %v1148
    %v1150 = vpop.f32.mrb[0].mxu0
    %1151 = vmatprep.mubr.bf16.mxu0 0
    %1152 = vmatmul.mubr.bf16.gmra.mrb[0].mxu0 %v1012
    %v1153 = vpop.f32.mrb[0].mxu0
    %v1154 = vadd.f32 %v1037, %v1153
    %v1155 = vpop.f32.mrb[0].mxu0
    %v1156 = vpop.f32.mrb[0].mxu0
    %v1157 = vadd.f32 %v1037, %v1156
    %v1158 = vpop.f32.mrb[0].mxu0
    %1159 = vmatprep.mubr.bf16.mxu0 0
    %1160 = vmatmul.mubr.bf16.gmra.mrb[0].mxu0 %v1013
    %v1161 = vpop.f32.mrb[0].mxu0
    %v1162 = vadd.f32 %v1037, %v1161
    %v1163 = vpop.f32.mrb[0].mxu0
    %v1164 = vpop.f32.mrb[0].mxu0
    %v1165 = vadd.f32 %v1037, %v1164
    %v1166 = vpop.f32.mrb[0].mxu0
    %1167 = vmatprep.mubr.bf16.mxu0 0
    %1168 = vmatmul.mubr.bf16.gmra.mrb[0].mxu0 %v1014
    %v1169 = vpop.f32.mrb[0].mxu0
    %v1170 = vadd.f32 %v1037, %v1169
    %v1171 = vpop.f32.mrb[0].mxu0
    %v1172 = vpop.f32.mrb[0].mxu0
    %v1173 = vadd.f32 %v1037, %v1172
    %v1174 = vpop.f32.mrb[0].mxu0
    %1175 = vmatprep.mubr.bf16.mxu0 0
    %1176 = vmatmul.mubr.bf16.gmra.mrb[0].mxu0 %v1015
    %v1177 = vpop.f32.mrb[0].mxu0
    %v1178 = vadd.f32 %v1037, %v1177
    %v1179 = vpop.f32.mrb[0].mxu0
    %v1180 = vpop.f32.mrb[0].mxu0
    %v1181 = vadd.f32 %v1037, %v1180
    %v1182 = vpop.f32.mrb[0].mxu0
    %1183 = vdwg.mxu0
    %v1184 = vpack.c.bf16 %v1125, %v1122
    %v1185 = vpack.c.bf16 %v1133, %v1130
    %v1186 = vpack.c.bf16 %v1141, %v1138
    %v1187 = vpack.c.bf16 %v1149, %v1146
    %v1188 = vpack.c.bf16 %v1157, %v1154
    %v1189 = vpack.c.bf16 %v1165, %v1162
    %v1190 = vpack.c.bf16 %v1173, %v1170
    %v1191 = vpack.c.bf16 %v1181, %v1178
    %1192 = vmatprep.subr.bf16.mxu0 0
    %1193 = vmatpush1.bf16.xpose.msra.mxu0 %v851
    %1194 = vmatprep.subr.bf16.mxu0 0
    %1195 = vmatpush1.bf16.xpose.msra.mxu0 0
    %1196 = vmatprep.subr.bf16.mxu0 0
    %1197 = vmatpush1.bf16.xpose.msra.mxu0 0
    %1198 = vmatprep.subr.bf16.mxu0 0
    %1199 = vmatpush1.bf16.xpose.msra.mxu0 0
    %1200 = vmatprep.subr.bf16.mxu0 0
    %1201 = vmatpush1.bf16.xpose.msra.mxu0 0
    %1202 = vmatprep.subr.bf16.mxu0 0
    %1203 = vmatpush1.bf16.xpose.msra.mxu0 0
    %1204 = vmatprep.subr.bf16.mxu0 0
    %1205 = vmatpush1.bf16.xpose.msra.mxu0 0
    %1206 = vmatprep.subr.bf16.mxu0 0
    %1207 = vmatpush1.bf16.xpose.msra.mxu0 0
    %1208 = vmatprep.subr.bf16.mxu0 0
    %1209 = vmatpush1.bf16.xpose.msra.mxu0 0
    %1210 = vmatprep.subr.bf16.mxu0 0
    %1211 = vmatpush1.bf16.xpose.msra.mxu0 0
    %1212 = vmatprep.subr.bf16.mxu0 0
    %1213 = vmatpush1.bf16.xpose.msra.mxu0 0
    %1214 = vmatprep.subr.bf16.mxu0 0
    %1215 = vmatpush1.bf16.xpose.msra.mxu0 0
    %1216 = vmatprep.subr.bf16.mxu0 0
    %1217 = vmatpush1.bf16.xpose.msra.mxu0 0
    %1218 = vmatprep.subr.bf16.mxu0 0
    %1219 = vmatpush1.bf16.xpose.msra.mxu0 0
    %1220 = vmatprep.subr.bf16.mxu0 0
    %1221 = vmatpush1.bf16.xpose.msra.mxu0 0
    %1222 = vmatprep.subr.bf16.mxu0 0
    %1223 = vmatpush1.bf16.xpose.msra.mxu0 0
    %1224 = vmatprep.mubr.bf16.mxu0 0
    %1225 = vmatmul.mubr.bf16.gmra.mrb[0].mxu0 %v1184
    %v1226 = vpop.f32.mrb[0].mxu0
    %v1227 = vadd.f32 0.0, %v1226
    %v1228 = vpop.f32.mrb[0].mxu0
    %v1229 = vpop.f32.mrb[0].mxu0
    %v1230 = vadd.f32 0.0, %v1229
    %v1231 = vpop.f32.mrb[0].mxu0
    %1232 = vdwg.mxu0
    %1233 = vmatprep.subr.bf16.mxu0 0
    %1234 = vmatpush1.bf16.xpose.msra.mxu0 %v852
    %1235 = vmatprep.subr.bf16.mxu0 0
    %1236 = vmatpush1.bf16.xpose.msra.mxu0 0
    %1237 = vmatprep.subr.bf16.mxu0 0
    %1238 = vmatpush1.bf16.xpose.msra.mxu0 0
    %1239 = vmatprep.subr.bf16.mxu0 0
    %1240 = vmatpush1.bf16.xpose.msra.mxu0 0
    %1241 = vmatprep.subr.bf16.mxu0 0
    %1242 = vmatpush1.bf16.xpose.msra.mxu0 0
    %1243 = vmatprep.subr.bf16.mxu0 0
    %1244 = vmatpush1.bf16.xpose.msra.mxu0 0
    %1245 = vmatprep.subr.bf16.mxu0 0
    %1246 = vmatpush1.bf16.xpose.msra.mxu0 0
    %1247 = vmatprep.subr.bf16.mxu0 0
    %1248 = vmatpush1.bf16.xpose.msra.mxu0 0
    %1249 = vmatprep.subr.bf16.mxu0 0
    %1250 = vmatpush1.bf16.xpose.msra.mxu0 0
    %1251 = vmatprep.subr.bf16.mxu0 0
    %1252 = vmatpush1.bf16.xpose.msra.mxu0 0
    %1253 = vmatprep.subr.bf16.mxu0 0
    %1254 = vmatpush1.bf16.xpose.msra.mxu0 0
    %1255 = vmatprep.subr.bf16.mxu0 0
    %1256 = vmatpush1.bf16.xpose.msra.mxu0 0
    %1257 = vmatprep.subr.bf16.mxu0 0
    %1258 = vmatpush1.bf16.xpose.msra.mxu0 0
    %1259 = vmatprep.subr.bf16.mxu0 0
    %1260 = vmatpush1.bf16.xpose.msra.mxu0 0
    %1261 = vmatprep.subr.bf16.mxu0 0
    %1262 = vmatpush1.bf16.xpose.msra.mxu0 0
    %1263 = vmatprep.subr.bf16.mxu0 0
    %1264 = vmatpush1.bf16.xpose.msra.mxu0 0
    %1265 = vmatprep.mubr.bf16.mxu0 0
    %1266 = vmatmul.mubr.bf16.gmra.mrb[0].mxu0 %v1185
    %v1267 = vpop.f32.mrb[0].mxu0
    %v1268 = vadd.f32 0.0, %v1267
    %v1269 = vpop.f32.mrb[0].mxu0
    %v1270 = vpop.f32.mrb[0].mxu0
    %v1271 = vadd.f32 0.0, %v1270
    %v1272 = vpop.f32.mrb[0].mxu0
    %1273 = vdwg.mxu0
    %1274 = vmatprep.subr.bf16.mxu0 0
    %1275 = vmatpush1.bf16.xpose.msra.mxu0 %v853
    %1276 = vmatprep.subr.bf16.mxu0 0
    %1277 = vmatpush1.bf16.xpose.msra.mxu0 0
    %1278 = vmatprep.subr.bf16.mxu0 0
    %1279 = vmatpush1.bf16.xpose.msra.mxu0 0
    %1280 = vmatprep.subr.bf16.mxu0 0
    %1281 = vmatpush1.bf16.xpose.msra.mxu0 0
    %1282 = vmatprep.subr.bf16.mxu0 0
    %1283 = vmatpush1.bf16.xpose.msra.mxu0 0
    %1284 = vmatprep.subr.bf16.mxu0 0
    %1285 = vmatpush1.bf16.xpose.msra.mxu0 0
    %1286 = vmatprep.subr.bf16.mxu0 0
    %1287 = vmatpush1.bf16.xpose.msra.mxu0 0
    %1288 = vmatprep.subr.bf16.mxu0 0
    %1289 = vmatpush1.bf16.xpose.msra.mxu0 0
    %1290 = vmatprep.subr.bf16.mxu0 0
    %1291 = vmatpush1.bf16.xpose.msra.mxu0 0
    %1292 = vmatprep.subr.bf16.mxu0 0
    %1293 = vmatpush1.bf16.xpose.msra.mxu0 0
    %1294 = vmatprep.subr.bf16.mxu0 0
    %1295 = vmatpush1.bf16.xpose.msra.mxu0 0
    %1296 = vmatprep.subr.bf16.mxu0 0
    %1297 = vmatpush1.bf16.xpose.msra.mxu0 0
    %1298 = vmatprep.subr.bf16.mxu0 0
    %1299 = vmatpush1.bf16.xpose.msra.mxu0 0
    %1300 = vmatprep.subr.bf16.mxu0 0
    %1301 = vmatpush1.bf16.xpose.msra.mxu0 0
    %1302 = vmatprep.subr.bf16.mxu0 0
    %1303 = vmatpush1.bf16.xpose.msra.mxu0 0
    %1304 = vmatprep.subr.bf16.mxu0 0
    %1305 = vmatpush1.bf16.xpose.msra.mxu0 0
    %1306 = vmatprep.mubr.bf16.mxu0 0
    %1307 = vmatmul.mubr.bf16.gmra.mrb[0].mxu0 %v1186
    %v1308 = vpop.f32.mrb[0].mxu0
    %v1309 = vadd.f32 0.0, %v1308
    %v1310 = vpop.f32.mrb[0].mxu0
    %v1311 = vpop.f32.mrb[0].mxu0
    %v1312 = vadd.f32 0.0, %v1311
    %v1313 = vpop.f32.mrb[0].mxu0
    %1314 = vdwg.mxu0
    %1315 = vmatprep.subr.bf16.mxu0 0
    %1316 = vmatpush1.bf16.xpose.msra.mxu0 %v854
    %1317 = vmatprep.subr.bf16.mxu0 0
    %1318 = vmatpush1.bf16.xpose.msra.mxu0 0
    %1319 = vmatprep.subr.bf16.mxu0 0
    %1320 = vmatpush1.bf16.xpose.msra.mxu0 0
    %1321 = vmatprep.subr.bf16.mxu0 0
    %1322 = vmatpush1.bf16.xpose.msra.mxu0 0
    %1323 = vmatprep.subr.bf16.mxu0 0
    %1324 = vmatpush1.bf16.xpose.msra.mxu0 0
    %1325 = vmatprep.subr.bf16.mxu0 0
    %1326 = vmatpush1.bf16.xpose.msra.mxu0 0
    %1327 = vmatprep.subr.bf16.mxu0 0
    %1328 = vmatpush1.bf16.xpose.msra.mxu0 0
    %1329 = vmatprep.subr.bf16.mxu0 0
    %1330 = vmatpush1.bf16.xpose.msra.mxu0 0
    %1331 = vmatprep.subr.bf16.mxu0 0
    %1332 = vmatpush1.bf16.xpose.msra.mxu0 0
    %1333 = vmatprep.subr.bf16.mxu0 0
    %1334 = vmatpush1.bf16.xpose.msra.mxu0 0
    %1335 = vmatprep.subr.bf16.mxu0 0
    %1336 = vmatpush1.bf16.xpose.msra.mxu0 0
    %1337 = vmatprep.subr.bf16.mxu0 0
    %1338 = vmatpush1.bf16.xpose.msra.mxu0 0
    %1339 = vmatprep.subr.bf16.mxu0 0
    %1340 = vmatpush1.bf16.xpose.msra.mxu0 0
    %1341 = vmatprep.subr.bf16.mxu0 0
    %1342 = vmatpush1.bf16.xpose.msra.mxu0 0
    %1343 = vmatprep.subr.bf16.mxu0 0
    %1344 = vmatpush1.bf16.xpose.msra.mxu0 0
    %1345 = vmatprep.subr.bf16.mxu0 0
    %1346 = vmatpush1.bf16.xpose.msra.mxu0 0
    %1347 = vmatprep.mubr.bf16.mxu0 0
    %1348 = vmatmul.mubr.bf16.gmra.mrb[0].mxu0 %v1187
    %v1349 = vpop.f32.mrb[0].mxu0
    %v1350 = vadd.f32 0.0, %v1349
    %v1351 = vpop.f32.mrb[0].mxu0
    %v1352 = vpop.f32.mrb[0].mxu0
    %v1353 = vadd.f32 0.0, %v1352
    %v1354 = vpop.f32.mrb[0].mxu0
    %1355 = vdwg.mxu0
    %1356 = vmatprep.subr.bf16.mxu0 0
    %1357 = vmatpush1.bf16.xpose.msra.mxu0 %v855
    %1358 = vmatprep.subr.bf16.mxu0 0
    %1359 = vmatpush1.bf16.xpose.msra.mxu0 0
    %1360 = vmatprep.subr.bf16.mxu0 0
    %1361 = vmatpush1.bf16.xpose.msra.mxu0 0
    %1362 = vmatprep.subr.bf16.mxu0 0
    %1363 = vmatpush1.bf16.xpose.msra.mxu0 0
    %1364 = vmatprep.subr.bf16.mxu0 0
    %1365 = vmatpush1.bf16.xpose.msra.mxu0 0
    %1366 = vmatprep.subr.bf16.mxu0 0
    %1367 = vmatpush1.bf16.xpose.msra.mxu0 0
    %1368 = vmatprep.subr.bf16.mxu0 0
    %1369 = vmatpush1.bf16.xpose.msra.mxu0 0
    %1370 = vmatprep.subr.bf16.mxu0 0
    %1371 = vmatpush1.bf16.xpose.msra.mxu0 0
    %1372 = vmatprep.subr.bf16.mxu0 0
    %1373 = vmatpush1.bf16.xpose.msra.mxu0 0
    %1374 = vmatprep.subr.bf16.mxu0 0
    %1375 = vmatpush1.bf16.xpose.msra.mxu0 0
    %1376 = vmatprep.subr.bf16.mxu0 0
    %1377 = vmatpush1.bf16.xpose.msra.mxu0 0
    %1378 = vmatprep.subr.bf16.mxu0 0
    %1379 = vmatpush1.bf16.xpose.msra.mxu0 0
    %1380 = vmatprep.subr.bf16.mxu0 0
    %1381 = vmatpush1.bf16.xpose.msra.mxu0 0
    %1382 = vmatprep.subr.bf16.mxu0 0
    %1383 = vmatpush1.bf16.xpose.msra.mxu0 0
    %1384 = vmatprep.subr.bf16.mxu0 0
    %1385 = vmatpush1.bf16.xpose.msra.mxu0 0
    %1386 = vmatprep.subr.bf16.mxu0 0
    %1387 = vmatpush1.bf16.xpose.msra.mxu0 0
    %1388 = vmatprep.mubr.bf16.mxu0 0
    %1389 = vmatmul.mubr.bf16.gmra.mrb[0].mxu0 %v1188
    %v1390 = vpop.f32.mrb[0].mxu0
    %v1391 = vadd.f32 0.0, %v1390
    %v1392 = vpop.f32.mrb[0].mxu0
    %v1393 = vpop.f32.mrb[0].mxu0
    %v1394 = vadd.f32 0.0, %v1393
    %v1395 = vpop.f32.mrb[0].mxu0
    %1396 = vdwg.mxu0
    %1397 = vmatprep.subr.bf16.mxu0 0
    %1398 = vmatpush1.bf16.xpose.msra.mxu0 %v856
    %1399 = vmatprep.subr.bf16.mxu0 0
    %1400 = vmatpush1.bf16.xpose.msra.mxu0 0
    %1401 = vmatprep.subr.bf16.mxu0 0
    %1402 = vmatpush1.bf16.xpose.msra.mxu0 0
    %1403 = vmatprep.subr.bf16.mxu0 0
    %1404 = vmatpush1.bf16.xpose.msra.mxu0 0
    %1405 = vmatprep.subr.bf16.mxu0 0
    %1406 = vmatpush1.bf16.xpose.msra.mxu0 0
    %1407 = vmatprep.subr.bf16.mxu0 0
    %1408 = vmatpush1.bf16.xpose.msra.mxu0 0
    %1409 = vmatprep.subr.bf16.mxu0 0
    %1410 = vmatpush1.bf16.xpose.msra.mxu0 0
    %1411 = vmatprep.subr.bf16.mxu0 0
    %1412 = vmatpush1.bf16.xpose.msra.mxu0 0
    %1413 = vmatprep.subr.bf16.mxu0 0
    %1414 = vmatpush1.bf16.xpose.msra.mxu0 0
    %1415 = vmatprep.subr.bf16.mxu0 0
    %1416 = vmatpush1.bf16.xpose.msra.mxu0 0
    %1417 = vmatprep.subr.bf16.mxu0 0
    %1418 = vmatpush1.bf16.xpose.msra.mxu0 0
    %1419 = vmatprep.subr.bf16.mxu0 0
    %1420 = vmatpush1.bf16.xpose.msra.mxu0 0
    %1421 = vmatprep.subr.bf16.mxu0 0
    %1422 = vmatpush1.bf16.xpose.msra.mxu0 0
    %1423 = vmatprep.subr.bf16.mxu0 0
    %1424 = vmatpush1.bf16.xpose.msra.mxu0 0
    %1425 = vmatprep.subr.bf16.mxu0 0
    %1426 = vmatpush1.bf16.xpose.msra.mxu0 0
    %1427 = vmatprep.subr.bf16.mxu0 0
    %1428 = vmatpush1.bf16.xpose.msra.mxu0 0
    %1429 = vmatprep.mubr.bf16.mxu0 0
    %1430 = vmatmul.mubr.bf16.gmra.mrb[0].mxu0 %v1189
    %v1431 = vpop.f32.mrb[0].mxu0
    %v1432 = vadd.f32 0.0, %v1431
    %v1433 = vpop.f32.mrb[0].mxu0
    %v1434 = vpop.f32.mrb[0].mxu0
    %v1435 = vadd.f32 0.0, %v1434
    %v1436 = vpop.f32.mrb[0].mxu0
    %1437 = vdwg.mxu0
    %1438 = vmatprep.subr.bf16.mxu0 0
    %1439 = vmatpush1.bf16.xpose.msra.mxu0 %v857
    %1440 = vmatprep.subr.bf16.mxu0 0
    %1441 = vmatpush1.bf16.xpose.msra.mxu0 0
    %1442 = vmatprep.subr.bf16.mxu0 0
    %1443 = vmatpush1.bf16.xpose.msra.mxu0 0
    %1444 = vmatprep.subr.bf16.mxu0 0
    %1445 = vmatpush1.bf16.xpose.msra.mxu0 0
    %1446 = vmatprep.subr.bf16.mxu0 0
    %1447 = vmatpush1.bf16.xpose.msra.mxu0 0
    %1448 = vmatprep.subr.bf16.mxu0 0
    %1449 = vmatpush1.bf16.xpose.msra.mxu0 0
    %1450 = vmatprep.subr.bf16.mxu0 0
    %1451 = vmatpush1.bf16.xpose.msra.mxu0 0
    %1452 = vmatprep.subr.bf16.mxu0 0
    %1453 = vmatpush1.bf16.xpose.msra.mxu0 0
    %1454 = vmatprep.subr.bf16.mxu0 0
    %1455 = vmatpush1.bf16.xpose.msra.mxu0 0
    %1456 = vmatprep.subr.bf16.mxu0 0
    %1457 = vmatpush1.bf16.xpose.msra.mxu0 0
    %1458 = vmatprep.subr.bf16.mxu0 0
    %1459 = vmatpush1.bf16.xpose.msra.mxu0 0
    %1460 = vmatprep.subr.bf16.mxu0 0
    %1461 = vmatpush1.bf16.xpose.msra.mxu0 0
    %1462 = vmatprep.subr.bf16.mxu0 0
    %1463 = vmatpush1.bf16.xpose.msra.mxu0 0
    %1464 = vmatprep.subr.bf16.mxu0 0
    %1465 = vmatpush1.bf16.xpose.msra.mxu0 0
    %1466 = vmatprep.subr.bf16.mxu0 0
    %1467 = vmatpush1.bf16.xpose.msra.mxu0 0
    %1468 = vmatprep.subr.bf16.mxu0 0
    %1469 = vmatpush1.bf16.xpose.msra.mxu0 0
    %1470 = vmatprep.mubr.bf16.mxu0 0
    %1471 = vmatmul.mubr.bf16.gmra.mrb[0].mxu0 %v1190
    %v1472 = vpop.f32.mrb[0].mxu0
    %v1473 = vadd.f32 0.0, %v1472
    %v1474 = vpop.f32.mrb[0].mxu0
    %v1475 = vpop.f32.mrb[0].mxu0
    %v1476 = vadd.f32 0.0, %v1475
    %v1477 = vpop.f32.mrb[0].mxu0
    %1478 = vdwg.mxu0
    %1479 = vmatprep.subr.bf16.mxu0 0
    %1480 = vmatpush1.bf16.xpose.msra.mxu0 %v858
    %1481 = vmatprep.subr.bf16.mxu0 0
    %1482 = vmatpush1.bf16.xpose.msra.mxu0 0
    %1483 = vmatprep.subr.bf16.mxu0 0
    %1484 = vmatpush1.bf16.xpose.msra.mxu0 0
    %1485 = vmatprep.subr.bf16.mxu0 0
    %1486 = vmatpush1.bf16.xpose.msra.mxu0 0
    %1487 = vmatprep.subr.bf16.mxu0 0
    %1488 = vmatpush1.bf16.xpose.msra.mxu0 0
    %1489 = vmatprep.subr.bf16.mxu0 0
    %1490 = vmatpush1.bf16.xpose.msra.mxu0 0
    %1491 = vmatprep.subr.bf16.mxu0 0
    %1492 = vmatpush1.bf16.xpose.msra.mxu0 0
    %1493 = vmatprep.subr.bf16.mxu0 0
    %1494 = vmatpush1.bf16.xpose.msra.mxu0 0
    %1495 = vmatprep.subr.bf16.mxu0 0
    %1496 = vmatpush1.bf16.xpose.msra.mxu0 0
    %1497 = vmatprep.subr.bf16.mxu0 0
    %1498 = vmatpush1.bf16.xpose.msra.mxu0 0
    %1499 = vmatprep.subr.bf16.mxu0 0
    %1500 = vmatpush1.bf16.xpose.msra.mxu0 0
    %1501 = vmatprep.subr.bf16.mxu0 0
    %1502 = vmatpush1.bf16.xpose.msra.mxu0 0
    %1503 = vmatprep.subr.bf16.mxu0 0
    %1504 = vmatpush1.bf16.xpose.msra.mxu0 0
    %1505 = vmatprep.subr.bf16.mxu0 0
    %1506 = vmatpush1.bf16.xpose.msra.mxu0 0
    %1507 = vmatprep.subr.bf16.mxu0 0
    %1508 = vmatpush1.bf16.xpose.msra.mxu0 0
    %1509 = vmatprep.subr.bf16.mxu0 0
    %1510 = vmatpush1.bf16.xpose.msra.mxu0 0
    %1511 = vmatprep.mubr.bf16.mxu0 0
    %1512 = vmatmul.mubr.bf16.gmra.mrb[0].mxu0 %v1191
    %v1513 = vpop.f32.mrb[0].mxu0
    %v1514 = vadd.f32 0.0, %v1513
    %v1515 = vpop.f32.mrb[0].mxu0
    %v1516 = vpop.f32.mrb[0].mxu0
    %v1517 = vadd.f32 0.0, %v1516
    %v1518 = vpop.f32.mrb[0].mxu0
    %1519 = vdwg.mxu0
    %v1520 = vmul.f32 %v1227, 0.17677669
    %v1521 = vmul.f32 %v1230, 0.17677669
    %v1522 = vmul.f32 %v1268, 0.17677669
    %v1523 = vmul.f32 %v1271, 0.17677669
    %v1524 = vmul.f32 %v1309, 0.17677669
    %v1525 = vmul.f32 %v1312, 0.17677669
    %v1526 = vmul.f32 %v1350, 0.17677669
    %v1527 = vmul.f32 %v1353, 0.17677669
    %v1528 = vmul.f32 %v1391, 0.17677669
    %v1529 = vmul.f32 %v1394, 0.17677669
    %v1530 = vmul.f32 %v1432, 0.17677669
    %v1531 = vmul.f32 %v1435, 0.17677669
    %v1532 = vmul.f32 %v1473, 0.17677669
    %v1533 = vmul.f32 %v1476, 0.17677669
    %v1534 = vmul.f32 %v1514, 0.17677669
    %v1535 = vmul.f32 %v1517, 0.17677669
    %vm1536 = vcmask 130048
    %v1537 = vsel %vm1536, %v1520, -inf
    %1538 = vmax.xlane.f32.xlu0 %v1537
    %v1539 = vpop.xlane.xlu0 %1538
    %v1540 = vsel %vm1536, %v1521, -inf
    %1541 = vmax.xlane.f32.xlu0 %v1540
    %v1542 = vpop.xlane.xlu0 %1541
    %v1543 = vsel %vm1536, %v1522, -inf
    %1544 = vmax.xlane.f32.xlu0 %v1543
    %v1545 = vpop.xlane.xlu0 %1544
    %v1546 = vsel %vm1536, %v1523, -inf
    %1547 = vmax.xlane.f32.xlu0 %v1546
    %v1548 = vpop.xlane.xlu0 %1547
    %v1549 = vsel %vm1536, %v1524, -inf
    %1550 = vmax.xlane.f32.xlu0 %v1549
    %v1551 = vpop.xlane.xlu0 %1550
    %v1552 = vsel %vm1536, %v1525, -inf
    %1553 = vmax.xlane.f32.xlu0 %v1552
    %v1554 = vpop.xlane.xlu0 %1553
    %v1555 = vsel %vm1536, %v1526, -inf
    %1556 = vmax.xlane.f32.xlu0 %v1555
    %v1557 = vpop.xlane.xlu0 %1556
    %v1558 = vsel %vm1536, %v1527, -inf
    %1559 = vmax.xlane.f32.xlu0 %v1558
    %v1560 = vpop.xlane.xlu0 %1559
    %v1561 = vsel %vm1536, %v1528, -inf
    %1562 = vmax.xlane.f32.xlu0 %v1561
    %v1563 = vpop.xlane.xlu0 %1562
    %v1564 = vsel %vm1536, %v1529, -inf
    %1565 = vmax.xlane.f32.xlu0 %v1564
    %v1566 = vpop.xlane.xlu0 %1565
    %v1567 = vsel %vm1536, %v1530, -inf
    %1568 = vmax.xlane.f32.xlu0 %v1567
    %v1569 = vpop.xlane.xlu0 %1568
    %v1570 = vsel %vm1536, %v1531, -inf
    %1571 = vmax.xlane.f32.xlu0 %v1570
    %v1572 = vpop.xlane.xlu0 %1571
    %v1573 = vsel %vm1536, %v1532, -inf
    %1574 = vmax.xlane.f32.xlu0 %v1573
    %v1575 = vpop.xlane.xlu0 %1574
    %v1576 = vsel %vm1536, %v1533, -inf
    %1577 = vmax.xlane.f32.xlu0 %v1576
    %v1578 = vpop.xlane.xlu0 %1577
    %v1579 = vsel %vm1536, %v1534, -inf
    %1580 = vmax.xlane.f32.xlu0 %v1579
    %v1581 = vpop.xlane.xlu0 %1580
    %v1582 = vsel %vm1536, %v1535, -inf
    %1583 = vmax.xlane.f32.xlu0 %v1582
    %v1584 = vpop.xlane.xlu0 %1583
    %v1585 = vsub.f32 %v1520, %v1539
    %v1586 = vsub.f32 %v1521, %v1542
    %v1587 = vsub.f32 %v1522, %v1545
    %v1588 = vsub.f32 %v1523, %v1548
    %v1589 = vsub.f32 %v1524, %v1551
    %v1590 = vsub.f32 %v1525, %v1554
    %v1591 = vsub.f32 %v1526, %v1557
    %v1592 = vsub.f32 %v1527, %v1560
    %v1593 = vsub.f32 %v1528, %v1563
    %v1594 = vsub.f32 %v1529, %v1566
    %v1595 = vsub.f32 %v1530, %v1569
    %v1596 = vsub.f32 %v1531, %v1572
    %v1597 = vsub.f32 %v1532, %v1575
    %v1598 = vsub.f32 %v1533, %v1578
    %v1599 = vsub.f32 %v1534, %v1581
    %v1600 = vsub.f32 %v1535, %v1584
    %v1601 = vmul.f32 %v1585, 1.442695
    %v1602 = vpow.pop %v1601
    %v1603 = vmul.f32 %v1586, 1.442695
    %v1604 = vpow.pop %v1603
    %v1605 = vmul.f32 %v1587, 1.442695
    %v1606 = vpow.pop %v1605
    %v1607 = vmul.f32 %v1588, 1.442695
    %v1608 = vpow.pop %v1607
    %v1609 = vmul.f32 %v1589, 1.442695
    %v1610 = vpow.pop %v1609
    %v1611 = vmul.f32 %v1590, 1.442695
    %v1612 = vpow.pop %v1611
    %v1613 = vmul.f32 %v1591, 1.442695
    %v1614 = vpow.pop %v1613
    %v1615 = vmul.f32 %v1592, 1.442695
    %v1616 = vpow.pop %v1615
    %v1617 = vmul.f32 %v1593, 1.442695
    %v1618 = vpow.pop %v1617
    %v1619 = vmul.f32 %v1594, 1.442695
    %v1620 = vpow.pop %v1619
    %v1621 = vmul.f32 %v1595, 1.442695
    %v1622 = vpow.pop %v1621
    %v1623 = vmul.f32 %v1596, 1.442695
    %v1624 = vpow.pop %v1623
    %v1625 = vmul.f32 %v1597, 1.442695
    %v1626 = vpow.pop %v1625
    %v1627 = vmul.f32 %v1598, 1.442695
    %v1628 = vpow.pop %v1627
    %v1629 = vmul.f32 %v1599, 1.442695
    %v1630 = vpow.pop %v1629
    %v1631 = vmul.f32 %v1600, 1.442695
    %v1632 = vpow.pop %v1631
    %v1633 = vsel %vm1536, %v1602, 0.0
    %1634 = vadd.xlane.f32.xlu0 %v1633
    %v1635 = vpop.xlane.xlu0 %1634
    %v1636 = vsel %vm1536, %v1604, 0.0
    %1637 = vadd.xlane.f32.xlu0 %v1636
    %v1638 = vpop.xlane.xlu0 %1637
    %v1639 = vsel %vm1536, %v1606, 0.0
    %1640 = vadd.xlane.f32.xlu0 %v1639
    %v1641 = vpop.xlane.xlu0 %1640
    %v1642 = vsel %vm1536, %v1608, 0.0
    %1643 = vadd.xlane.f32.xlu0 %v1642
    %v1644 = vpop.xlane.xlu0 %1643
    %v1645 = vsel %vm1536, %v1610, 0.0
    %1646 = vadd.xlane.f32.xlu0 %v1645
    %v1647 = vpop.xlane.xlu0 %1646
    %v1648 = vsel %vm1536, %v1612, 0.0
    %1649 = vadd.xlane.f32.xlu0 %v1648
    %v1650 = vpop.xlane.xlu0 %1649
    %v1651 = vsel %vm1536, %v1614, 0.0
    %1652 = vadd.xlane.f32.xlu0 %v1651
    %v1653 = vpop.xlane.xlu0 %1652
    %v1654 = vsel %vm1536, %v1616, 0.0
    %1655 = vadd.xlane.f32.xlu0 %v1654
    %v1656 = vpop.xlane.xlu0 %1655
    %v1657 = vsel %vm1536, %v1618, 0.0
    %1658 = vadd.xlane.f32.xlu0 %v1657
    %v1659 = vpop.xlane.xlu0 %1658
    %v1660 = vsel %vm1536, %v1620, 0.0
    %1661 = vadd.xlane.f32.xlu0 %v1660
    %v1662 = vpop.xlane.xlu0 %1661
    %v1663 = vsel %vm1536, %v1622, 0.0
    %1664 = vadd.xlane.f32.xlu0 %v1663
    %v1665 = vpop.xlane.xlu0 %1664
    %v1666 = vsel %vm1536, %v1624, 0.0
    %1667 = vadd.xlane.f32.xlu0 %v1666
    %v1668 = vpop.xlane.xlu0 %1667
    %v1669 = vsel %vm1536, %v1626, 0.0
    %1670 = vadd.xlane.f32.xlu0 %v1669
    %v1671 = vpop.xlane.xlu0 %1670
    %v1672 = vsel %vm1536, %v1628, 0.0
    %1673 = vadd.xlane.f32.xlu0 %v1672
    %v1674 = vpop.xlane.xlu0 %1673
    %v1675 = vsel %vm1536, %v1630, 0.0
    %1676 = vadd.xlane.f32.xlu0 %v1675
    %v1677 = vpop.xlane.xlu0 %1676
    %v1678 = vsel %vm1536, %v1632, 0.0
    %1679 = vadd.xlane.f32.xlu0 %v1678
    %v1680 = vpop.xlane.xlu0 %1679
    %v1681 = vrcp.pop %v1635
    %v1682 = vmul.f32 %v1602, %v1681
    %v1683 = vrcp.pop %v1638
    %v1684 = vmul.f32 %v1604, %v1683
    %v1685 = vrcp.pop %v1641
    %v1686 = vmul.f32 %v1606, %v1685
    %v1687 = vrcp.pop %v1644
    %v1688 = vmul.f32 %v1608, %v1687
    %v1689 = vrcp.pop %v1647
    %v1690 = vmul.f32 %v1610, %v1689
    %v1691 = vrcp.pop %v1650
    %v1692 = vmul.f32 %v1612, %v1691
    %v1693 = vrcp.pop %v1653
    %v1694 = vmul.f32 %v1614, %v1693
    %v1695 = vrcp.pop %v1656
    %v1696 = vmul.f32 %v1616, %v1695
    %v1697 = vrcp.pop %v1659
    %v1698 = vmul.f32 %v1618, %v1697
    %v1699 = vrcp.pop %v1662
    %v1700 = vmul.f32 %v1620, %v1699
    %v1701 = vrcp.pop %v1665
    %v1702 = vmul.f32 %v1622, %v1701
    %v1703 = vrcp.pop %v1668
    %v1704 = vmul.f32 %v1624, %v1703
    %v1705 = vrcp.pop %v1671
    %v1706 = vmul.f32 %v1626, %v1705
    %v1707 = vrcp.pop %v1674
    %v1708 = vmul.f32 %v1628, %v1707
    %v1709 = vrcp.pop %v1677
    %v1710 = vmul.f32 %v1630, %v1709
    %v1711 = vrcp.pop %v1680
    %v1712 = vmul.f32 %v1632, %v1711
    %v1713 = vpack.c.bf16 %v1684, %v1682
    %v1714 = vpack.c.bf16 %v1688, %v1686
    %v1715 = vpack.c.bf16 %v1692, %v1690
    %v1716 = vpack.c.bf16 %v1696, %v1694
    %v1717 = vpack.c.bf16 %v1700, %v1698
    %v1718 = vpack.c.bf16 %v1704, %v1702
    %v1719 = vpack.c.bf16 %v1708, %v1706
    %v1720 = vpack.c.bf16 %v1712, %v1710
    %v1722 = vsel %vm1536, %v1713, 0
    %1724 = vmatprep.subr.bf16.mxu0 0
    %1725 = vmatpush1.bf16.msra.mxu0 %v675
    %1726 = vmatprep.subr.bf16.mxu0 0
    %1727 = vmatpush1.bf16.msra.mxu0 0
    %1728 = vmatprep.subr.bf16.mxu0 0
    %1729 = vmatpush1.bf16.msra.mxu0 0
    %1730 = vmatprep.subr.bf16.mxu0 0
    %1731 = vmatpush1.bf16.msra.mxu0 0
    %1732 = vmatprep.subr.bf16.mxu0 0
    %1733 = vmatpush1.bf16.msra.mxu0 0
    %1734 = vmatprep.subr.bf16.mxu0 0
    %1735 = vmatpush1.bf16.msra.mxu0 0
    %1736 = vmatprep.subr.bf16.mxu0 0
    %1737 = vmatpush1.bf16.msra.mxu0 0
    %1738 = vmatprep.subr.bf16.mxu0 0
    %1739 = vmatpush1.bf16.msra.mxu0 0
    %1740 = vmatprep.subr.bf16.mxu0 0
    %1741 = vmatpush1.bf16.msra.mxu0 0
    %1742 = vmatprep.subr.bf16.mxu0 0
    %1743 = vmatpush1.bf16.msra.mxu0 0
    %1744 = vmatprep.subr.bf16.mxu0 0
    %1745 = vmatpush1.bf16.msra.mxu0 0
    %1746 = vmatprep.subr.bf16.mxu0 0
    %1747 = vmatpush1.bf16.msra.mxu0 0
    %1748 = vmatprep.subr.bf16.mxu0 0
    %1749 = vmatpush1.bf16.msra.mxu0 0
    %1750 = vmatprep.subr.bf16.mxu0 0
    %1751 = vmatpush1.bf16.msra.mxu0 0
    %1752 = vmatprep.subr.bf16.mxu0 0
    %1753 = vmatpush1.bf16.msra.mxu0 0
    %1754 = vmatprep.subr.bf16.mxu0 0
    %1755 = vmatpush1.bf16.msra.mxu0 0
    %1756 = vmatprep.mubr.bf16.mxu0 0
    %1757 = vmatmul.mubr.bf16.gmra.mrb[0].mxu0 %v1722
    %v1758 = vpop.f32.mrb[0].mxu0
    %v1759 = vadd.f32 0.0, %v1758
    %v1760 = vpop.f32.mrb[0].mxu0
    %v1761 = vpop.f32.mrb[0].mxu0
    %v1762 = vadd.f32 0.0, %v1761
    %v1763 = vpop.f32.mrb[0].mxu0
    %1764 = vdwg.mxu0
    %v1766 = vsel %vm1536, %v1714, 0
    %1768 = vmatprep.subr.bf16.mxu0 0
    %1769 = vmatpush1.bf16.msra.mxu0 %v676
    %1770 = vmatprep.subr.bf16.mxu0 0
    %1771 = vmatpush1.bf16.msra.mxu0 0
    %1772 = vmatprep.subr.bf16.mxu0 0
    %1773 = vmatpush1.bf16.msra.mxu0 0
    %1774 = vmatprep.subr.bf16.mxu0 0
    %1775 = vmatpush1.bf16.msra.mxu0 0
    %1776 = vmatprep.subr.bf16.mxu0 0
    %1777 = vmatpush1.bf16.msra.mxu0 0
    %1778 = vmatprep.subr.bf16.mxu0 0
    %1779 = vmatpush1.bf16.msra.mxu0 0
    %1780 = vmatprep.subr.bf16.mxu0 0
    %1781 = vmatpush1.bf16.msra.mxu0 0
    %1782 = vmatprep.subr.bf16.mxu0 0
    %1783 = vmatpush1.bf16.msra.mxu0 0
    %1784 = vmatprep.subr.bf16.mxu0 0
    %1785 = vmatpush1.bf16.msra.mxu0 0
    %1786 = vmatprep.subr.bf16.mxu0 0
    %1787 = vmatpush1.bf16.msra.mxu0 0
    %1788 = vmatprep.subr.bf16.mxu0 0
    %1789 = vmatpush1.bf16.msra.mxu0 0
    %1790 = vmatprep.subr.bf16.mxu0 0
    %1791 = vmatpush1.bf16.msra.mxu0 0
    %1792 = vmatprep.subr.bf16.mxu0 0
    %1793 = vmatpush1.bf16.msra.mxu0 0
    %1794 = vmatprep.subr.bf16.mxu0 0
    %1795 = vmatpush1.bf16.msra.mxu0 0
    %1796 = vmatprep.subr.bf16.mxu0 0
    %1797 = vmatpush1.bf16.msra.mxu0 0
    %1798 = vmatprep.subr.bf16.mxu0 0
    %1799 = vmatpush1.bf16.msra.mxu0 0
    %1800 = vmatprep.mubr.bf16.mxu0 0
    %1801 = vmatmul.mubr.bf16.gmra.mrb[0].mxu0 %v1766
    %v1802 = vpop.f32.mrb[0].mxu0
    %v1803 = vadd.f32 0.0, %v1802
    %v1804 = vpop.f32.mrb[0].mxu0
    %v1805 = vpop.f32.mrb[0].mxu0
    %v1806 = vadd.f32 0.0, %v1805
    %v1807 = vpop.f32.mrb[0].mxu0
    %1808 = vdwg.mxu0
    %v1810 = vsel %vm1536, %v1715, 0
    %1812 = vmatprep.subr.bf16.mxu0 0
    %1813 = vmatpush1.bf16.msra.mxu0 %v677
    %1814 = vmatprep.subr.bf16.mxu0 0
    %1815 = vmatpush1.bf16.msra.mxu0 0
    %1816 = vmatprep.subr.bf16.mxu0 0
    %1817 = vmatpush1.bf16.msra.mxu0 0
    %1818 = vmatprep.subr.bf16.mxu0 0
    %1819 = vmatpush1.bf16.msra.mxu0 0
    %1820 = vmatprep.subr.bf16.mxu0 0
    %1821 = vmatpush1.bf16.msra.mxu0 0
    %1822 = vmatprep.subr.bf16.mxu0 0
    %1823 = vmatpush1.bf16.msra.mxu0 0
    %1824 = vmatprep.subr.bf16.mxu0 0
    %1825 = vmatpush1.bf16.msra.mxu0 0
    %1826 = vmatprep.subr.bf16.mxu0 0
    %1827 = vmatpush1.bf16.msra.mxu0 0
    %1828 = vmatprep.subr.bf16.mxu0 0
    %1829 = vmatpush1.bf16.msra.mxu0 0
    %1830 = vmatprep.subr.bf16.mxu0 0
    %1831 = vmatpush1.bf16.msra.mxu0 0
    %1832 = vmatprep.subr.bf16.mxu0 0
    %1833 = vmatpush1.bf16.msra.mxu0 0
    %1834 = vmatprep.subr.bf16.mxu0 0
    %1835 = vmatpush1.bf16.msra.mxu0 0
    %1836 = vmatprep.subr.bf16.mxu0 0
    %1837 = vmatpush1.bf16.msra.mxu0 0
    %1838 = vmatprep.subr.bf16.mxu0 0
    %1839 = vmatpush1.bf16.msra.mxu0 0
    %1840 = vmatprep.subr.bf16.mxu0 0
    %1841 = vmatpush1.bf16.msra.mxu0 0
    %1842 = vmatprep.subr.bf16.mxu0 0
    %1843 = vmatpush1.bf16.msra.mxu0 0
    %1844 = vmatprep.mubr.bf16.mxu0 0
    %1845 = vmatmul.mubr.bf16.gmra.mrb[0].mxu0 %v1810
    %v1846 = vpop.f32.mrb[0].mxu0
    %v1847 = vadd.f32 0.0, %v1846
    %v1848 = vpop.f32.mrb[0].mxu0
    %v1849 = vpop.f32.mrb[0].mxu0
    %v1850 = vadd.f32 0.0, %v1849
    %v1851 = vpop.f32.mrb[0].mxu0
    %1852 = vdwg.mxu0
    %v1854 = vsel %vm1536, %v1716, 0
    %1856 = vmatprep.subr.bf16.mxu0 0
    %1857 = vmatpush1.bf16.msra.mxu0 %v678
    %1858 = vmatprep.subr.bf16.mxu0 0
    %1859 = vmatpush1.bf16.msra.mxu0 0
    %1860 = vmatprep.subr.bf16.mxu0 0
    %1861 = vmatpush1.bf16.msra.mxu0 0
    %1862 = vmatprep.subr.bf16.mxu0 0
    %1863 = vmatpush1.bf16.msra.mxu0 0
    %1864 = vmatprep.subr.bf16.mxu0 0
    %1865 = vmatpush1.bf16.msra.mxu0 0
    %1866 = vmatprep.subr.bf16.mxu0 0
    %1867 = vmatpush1.bf16.msra.mxu0 0
    %1868 = vmatprep.subr.bf16.mxu0 0
    %1869 = vmatpush1.bf16.msra.mxu0 0
    %1870 = vmatprep.subr.bf16.mxu0 0
    %1871 = vmatpush1.bf16.msra.mxu0 0
    %1872 = vmatprep.subr.bf16.mxu0 0
    %1873 = vmatpush1.bf16.msra.mxu0 0
    %1874 = vmatprep.subr.bf16.mxu0 0
    %1875 = vmatpush1.bf16.msra.mxu0 0
    %1876 = vmatprep.subr.bf16.mxu0 0
    %1877 = vmatpush1.bf16.msra.mxu0 0
    %1878 = vmatprep.subr.bf16.mxu0 0
    %1879 = vmatpush1.bf16.msra.mxu0 0
    %1880 = vmatprep.subr.bf16.mxu0 0
    %1881 = vmatpush1.bf16.msra.mxu0 0
    %1882 = vmatprep.subr.bf16.mxu0 0
    %1883 = vmatpush1.bf16.msra.mxu0 0
    %1884 = vmatprep.subr.bf16.mxu0 0
    %1885 = vmatpush1.bf16.msra.mxu0 0
    %1886 = vmatprep.subr.bf16.mxu0 0
    %1887 = vmatpush1.bf16.msra.mxu0 0
    %1888 = vmatprep.mubr.bf16.mxu0 0
    %1889 = vmatmul.mubr.bf16.gmra.mrb[0].mxu0 %v1854
    %v1890 = vpop.f32.mrb[0].mxu0
    %v1891 = vadd.f32 0.0, %v1890
    %v1892 = vpop.f32.mrb[0].mxu0
    %v1893 = vpop.f32.mrb[0].mxu0
    %v1894 = vadd.f32 0.0, %v1893
    %v1895 = vpop.f32.mrb[0].mxu0
    %1896 = vdwg.mxu0
    %v1898 = vsel %vm1536, %v1717, 0
    %1900 = vmatprep.subr.bf16.mxu0 0
    %1901 = vmatpush1.bf16.msra.mxu0 %v679
    %1902 = vmatprep.subr.bf16.mxu0 0
    %1903 = vmatpush1.bf16.msra.mxu0 0
    %1904 = vmatprep.subr.bf16.mxu0 0
    %1905 = vmatpush1.bf16.msra.mxu0 0
    %1906 = vmatprep.subr.bf16.mxu0 0
    %1907 = vmatpush1.bf16.msra.mxu0 0
    %1908 = vmatprep.subr.bf16.mxu0 0
    %1909 = vmatpush1.bf16.msra.mxu0 0
    %1910 = vmatprep.subr.bf16.mxu0 0
    %1911 = vmatpush1.bf16.msra.mxu0 0
    %1912 = vmatprep.subr.bf16.mxu0 0
    %1913 = vmatpush1.bf16.msra.mxu0 0
    %1914 = vmatprep.subr.bf16.mxu0 0
    %1915 = vmatpush1.bf16.msra.mxu0 0
    %1916 = vmatprep.subr.bf16.mxu0 0
    %1917 = vmatpush1.bf16.msra.mxu0 0
    %1918 = vmatprep.subr.bf16.mxu0 0
    %1919 = vmatpush1.bf16.msra.mxu0 0
    %1920 = vmatprep.subr.bf16.mxu0 0
    %1921 = vmatpush1.bf16.msra.mxu0 0
    %1922 = vmatprep.subr.bf16.mxu0 0
    %1923 = vmatpush1.bf16.msra.mxu0 0
    %1924 = vmatprep.subr.bf16.mxu0 0
    %1925 = vmatpush1.bf16.msra.mxu0 0
    %1926 = vmatprep.subr.bf16.mxu0 0
    %1927 = vmatpush1.bf16.msra.mxu0 0
    %1928 = vmatprep.subr.bf16.mxu0 0
    %1929 = vmatpush1.bf16.msra.mxu0 0
    %1930 = vmatprep.subr.bf16.mxu0 0
    %1931 = vmatpush1.bf16.msra.mxu0 0
    %1932 = vmatprep.mubr.bf16.mxu0 0
    %1933 = vmatmul.mubr.bf16.gmra.mrb[0].mxu0 %v1898
    %v1934 = vpop.f32.mrb[0].mxu0
    %v1935 = vadd.f32 0.0, %v1934
    %v1936 = vpop.f32.mrb[0].mxu0
    %v1937 = vpop.f32.mrb[0].mxu0
    %v1938 = vadd.f32 0.0, %v1937
    %v1939 = vpop.f32.mrb[0].mxu0
    %1940 = vdwg.mxu0
    %v1942 = vsel %vm1536, %v1718, 0
    %1944 = vmatprep.subr.bf16.mxu0 0
    %1945 = vmatpush1.bf16.msra.mxu0 %v680
    %1946 = vmatprep.subr.bf16.mxu0 0
    %1947 = vmatpush1.bf16.msra.mxu0 0
    %1948 = vmatprep.subr.bf16.mxu0 0
    %1949 = vmatpush1.bf16.msra.mxu0 0
    %1950 = vmatprep.subr.bf16.mxu0 0
    %1951 = vmatpush1.bf16.msra.mxu0 0
    %1952 = vmatprep.subr.bf16.mxu0 0
    %1953 = vmatpush1.bf16.msra.mxu0 0
    %1954 = vmatprep.subr.bf16.mxu0 0
    %1955 = vmatpush1.bf16.msra.mxu0 0
    %1956 = vmatprep.subr.bf16.mxu0 0
    %1957 = vmatpush1.bf16.msra.mxu0 0
    %1958 = vmatprep.subr.bf16.mxu0 0
    %1959 = vmatpush1.bf16.msra.mxu0 0
    %1960 = vmatprep.subr.bf16.mxu0 0
    %1961 = vmatpush1.bf16.msra.mxu0 0
    %1962 = vmatprep.subr.bf16.mxu0 0
    %1963 = vmatpush1.bf16.msra.mxu0 0
    %1964 = vmatprep.subr.bf16.mxu0 0
    %1965 = vmatpush1.bf16.msra.mxu0 0
    %1966 = vmatprep.subr.bf16.mxu0 0
    %1967 = vmatpush1.bf16.msra.mxu0 0
    %1968 = vmatprep.subr.bf16.mxu0 0
    %1969 = vmatpush1.bf16.msra.mxu0 0
    %1970 = vmatprep.subr.bf16.mxu0 0
    %1971 = vmatpush1.bf16.msra.mxu0 0
    %1972 = vmatprep.subr.bf16.mxu0 0
    %1973 = vmatpush1.bf16.msra.mxu0 0
    %1974 = vmatprep.subr.bf16.mxu0 0
    %1975 = vmatpush1.bf16.msra.mxu0 0
    %1976 = vmatprep.mubr.bf16.mxu0 0
    %1977 = vmatmul.mubr.bf16.gmra.mrb[0].mxu0 %v1942
    %v1978 = vpop.f32.mrb[0].mxu0
    %v1979 = vadd.f32 0.0, %v1978
    %v1980 = vpop.f32.mrb[0].mxu0
    %v1981 = vpop.f32.mrb[0].mxu0
    %v1982 = vadd.f32 0.0, %v1981
    %v1983 = vpop.f32.mrb[0].mxu0
    %1984 = vdwg.mxu0
    %v1986 = vsel %vm1536, %v1719, 0
    %1988 = vmatprep.subr.bf16.mxu0 0
    %1989 = vmatpush1.bf16.msra.mxu0 %v681
    %1990 = vmatprep.subr.bf16.mxu0 0
    %1991 = vmatpush1.bf16.msra.mxu0 0
    %1992 = vmatprep.subr.bf16.mxu0 0
    %1993 = vmatpush1.bf16.msra.mxu0 0
    %1994 = vmatprep.subr.bf16.mxu0 0
    %1995 = vmatpush1.bf16.msra.mxu0 0
    %1996 = vmatprep.subr.bf16.mxu0 0
    %1997 = vmatpush1.bf16.msra.mxu0 0
    %1998 = vmatprep.subr.bf16.mxu0 0
    %1999 = vmatpush1.bf16.msra.mxu0 0
    %2000 = vmatprep.subr.bf16.mxu0 0
    %2001 = vmatpush1.bf16.msra.mxu0 0
    %2002 = vmatprep.subr.bf16.mxu0 0
    %2003 = vmatpush1.bf16.msra.mxu0 0
    %2004 = vmatprep.subr.bf16.mxu0 0
    %2005 = vmatpush1.bf16.msra.mxu0 0
    %2006 = vmatprep.subr.bf16.mxu0 0
    %2007 = vmatpush1.bf16.msra.mxu0 0
    %2008 = vmatprep.subr.bf16.mxu0 0
    %2009 = vmatpush1.bf16.msra.mxu0 0
    %2010 = vmatprep.subr.bf16.mxu0 0
    %2011 = vmatpush1.bf16.msra.mxu0 0
    %2012 = vmatprep.subr.bf16.mxu0 0
    %2013 = vmatpush1.bf16.msra.mxu0 0
    %2014 = vmatprep.subr.bf16.mxu0 0
    %2015 = vmatpush1.bf16.msra.mxu0 0
    %2016 = vmatprep.subr.bf16.mxu0 0
    %2017 = vmatpush1.bf16.msra.mxu0 0
    %2018 = vmatprep.subr.bf16.mxu0 0
    %2019 = vmatpush1.bf16.msra.mxu0 0
    %2020 = vmatprep.mubr.bf16.mxu0 0
    %2021 = vmatmul.mubr.bf16.gmra.mrb[0].mxu0 %v1986
    %v2022 = vpop.f32.mrb[0].mxu0
    %v2023 = vadd.f32 0.0, %v2022
    %v2024 = vpop.f32.mrb[0].mxu0
    %v2025 = vpop.f32.mrb[0].mxu0
    %v2026 = vadd.f32 0.0, %v2025
    %v2027 = vpop.f32.mrb[0].mxu0
    %2028 = vdwg.mxu0
    %v2030 = vsel %vm1536, %v1720, 0
    %2032 = vmatprep.subr.bf16.mxu0 0
    %2033 = vmatpush1.bf16.msra.mxu0 %v682
    %2034 = vmatprep.subr.bf16.mxu0 0
    %2035 = vmatpush1.bf16.msra.mxu0 0
    %2036 = vmatprep.subr.bf16.mxu0 0
    %2037 = vmatpush1.bf16.msra.mxu0 0
    %2038 = vmatprep.subr.bf16.mxu0 0
    %2039 = vmatpush1.bf16.msra.mxu0 0
    %2040 = vmatprep.subr.bf16.mxu0 0
    %2041 = vmatpush1.bf16.msra.mxu0 0
    %2042 = vmatprep.subr.bf16.mxu0 0
    %2043 = vmatpush1.bf16.msra.mxu0 0
    %2044 = vmatprep.subr.bf16.mxu0 0
    %2045 = vmatpush1.bf16.msra.mxu0 0
    %2046 = vmatprep.subr.bf16.mxu0 0
    %2047 = vmatpush1.bf16.msra.mxu0 0
    %2048 = vmatprep.subr.bf16.mxu0 0
    %2049 = vmatpush1.bf16.msra.mxu0 0
    %2050 = vmatprep.subr.bf16.mxu0 0
    %2051 = vmatpush1.bf16.msra.mxu0 0
    %2052 = vmatprep.subr.bf16.mxu0 0
    %2053 = vmatpush1.bf16.msra.mxu0 0
    %2054 = vmatprep.subr.bf16.mxu0 0
    %2055 = vmatpush1.bf16.msra.mxu0 0
    %2056 = vmatprep.subr.bf16.mxu0 0
    %2057 = vmatpush1.bf16.msra.mxu0 0
    %2058 = vmatprep.subr.bf16.mxu0 0
    %2059 = vmatpush1.bf16.msra.mxu0 0
    %2060 = vmatprep.subr.bf16.mxu0 0
    %2061 = vmatpush1.bf16.msra.mxu0 0
    %2062 = vmatprep.subr.bf16.mxu0 0
    %2063 = vmatpush1.bf16.msra.mxu0 0
    %2064 = vmatprep.mubr.bf16.mxu0 0
    %2065 = vmatmul.mubr.bf16.gmra.mrb[0].mxu0 %v2030
    %v2066 = vpop.f32.mrb[0].mxu0
    %v2067 = vadd.f32 0.0, %v2066
    %v2068 = vpop.f32.mrb[0].mxu0
    %v2069 = vpop.f32.mrb[0].mxu0
    %v2070 = vadd.f32 0.0, %v2069
    %v2071 = vpop.f32.mrb[0].mxu0
    %2072 = vdwg.mxu0
    %2073 = vst [vmem:[#allocation2] sm:$0xff] %v1759
    %2074 = vst [vmem:[#allocation2 + $0x8] sm:$0xff] %v1762
    %2075 = vst [vmem:[#allocation2 + $0x10] sm:$0xff] %v1803
    %2076 = vst [vmem:[#allocation2 + $0x18] sm:$0xff] %v1806
    %2077 = vst [vmem:[#allocation2 + $0x20] sm:$0xff] %v1847
    %2078 = vst [vmem:[#allocation2 + $0x28] sm:$0xff] %v1850
    %2079 = vst [vmem:[#allocation2 + $0x30] sm:$0xff] %v1891
    %2080 = vst [vmem:[#allocation2 + $0x38] sm:$0xff] %v1894
    %2081 = vst [vmem:[#allocation2 + $0x40] sm:$0xff] %v1935
    %2082 = vst [vmem:[#allocation2 + $0x48] sm:$0xff] %v1938
    %2083 = vst [vmem:[#allocation2 + $0x50] sm:$0xff] %v1979
    %2084 = vst [vmem:[#allocation2 + $0x58] sm:$0xff] %v1982
    %2085 = vst [vmem:[#allocation2 + $0x60] sm:$0xff] %v2023
    %2086 = vst [vmem:[#allocation2 + $0x68] sm:$0xff] %v2026
    %2087 = vst [vmem:[#allocation2 + $0x70] sm:$0xff] %v2067
    %2088 = vst [vmem:[#allocation2 + $0x78] sm:$0xff] %v2070
    // Predicated region
    $region58: #{tpu_custom_call.1} parent=1 // pred_check
      _
    $region59: #{tpu_custom_call.1} parent=1 // pred_check_branch
      %2090 = sbr.rel (0) target = $region61
    $region60: #{tpu_custom_call.1} parent=1 // pred_region
      %s2092 = ssub.s32 2048, 2048
      %2093 = vsyncadd [#allocation3], %s2092
      %s2094 = sshll.u32 [#allocation2], 4
      %s2095 = int_to_ptr.vmem [resolvable:$true] %s2094
      %2100 = dma.vmem_to_hbm [thread:$0]  %s2095, 2048, %s14, [#allocation3], 128, 128, 8
    $region61: #{tpu_custom_call.1} parent=1 // pred_fallthru
      _
    // Predicated region
    $region62: #{tpu_custom_call.1} parent=1 // pred_check
      _
    $region63: #{tpu_custom_call.1} parent=1 // pred_check_branch
      %2102 = sbr.rel (0) target = $region65
    $region64: #{tpu_custom_call.1} parent=1 // pred_region
      %2103 = dma.done [#allocation3], 2048
    $region65: #{tpu_custom_call.1} parent=1 // pred_fallthru
      _
    %2104 = vsyncpa [#allocation3], 1

</llo_original>
